<compile_context>
chip_gen: v5e
topology: v5e:2x2
jax: 0.10.0
libtpu: 0.0.40
codegen_flags: <defaults>
</compile_context>

<pallas_src>
import math

import jax
import jax.numpy as jnp
from jax.experimental import pallas as pl
from jax.experimental.pallas import tpu as pltpu

# Small, module-consistent sizes.
B, S, D, H, DFF = 2, 8, 32, 4, 64
BS = B * S
DK = D // H
EPS = 1e-5  # PyTorch nn.LayerNorm default

# ---- packed weight slab column offsets (all matrices have D rows) -----------
_C_MQKV = 0                  # (D, 3D) self-attn fused q|k|v (q pre-scaled)
_C_MO = _C_MQKV + 3 * D      # (D, D)  self-attn output projection
_C_CQK = _C_MO + D           # (D, 2D) cross-attn fused q|k (q pre-scaled)
_C_CV = _C_CQK + 2 * D       # (D, D)  cross-attn v projection
_C_CO = _C_CV + D            # (D, D)  cross-attn output projection
_C_F1 = _C_CO + D            # (D, DFF) FFN layer 1
_C_F2A = _C_F1 + DFF         # (D, D)  FFN layer 2, input rows [:D]
_C_F2B = _C_F2A + D          # (D, D)  FFN layer 2, input rows [D:]
W_COLS = _C_F2B + D          # = 12*D

# ---- packed bias / LayerNorm slab: one row per vector, width 3*D ------------
VEC_W = 3 * D
(_R_MQKVB, _R_CQKB, _R_MOB, _R_CVB, _R_COB, _R_F1B, _R_F2B_ROW,
 _R_G0, _R_B0, _R_G1, _R_B1, _R_G2, _R_B2) = range(13)
VEC_ROWS = 13


# ---------------------------------------------------------------------------
# In-kernel helpers (traced inside the Pallas kernel body).
# ---------------------------------------------------------------------------
def _layernorm(v, g, b):
    mu = jnp.mean(v, axis=-1, keepdims=True)
    var = jnp.mean((v - mu) ** 2, axis=-1, keepdims=True)
    return (v - mu) * jax.lax.rsqrt(var + EPS) * g + b


def _mh_attention(q, k, v, wo, bo, bias):
    """All-head attention on already-projected, pre-scaled (B*S, D) slabs.

    Heads are folded into the leading batch dim -> one (H*B, S, DK) tensor per
    operand, so the score and context matmuls plus the entire softmax chain
    (max/exp/sum/reciprocal) are issued once for all heads.
    bias: additive mask bias of shape (S, S) or None.
    """
    def split_heads(t):  # (BS, D) -> (H*B, S, DK); lane slices + tile-aligned reshapes
        return jnp.concatenate(
            [t[:, h * DK:(h + 1) * DK].reshape(B, S, DK) for h in range(H)],
            axis=0)

    qh, kh, vh = split_heads(q), split_heads(k), split_heads(v)
    s = jnp.einsum("nqd,nkd->nqk", qh, kh, preferred_element_type=jnp.float32)
    if bias is not None:
        s = s + bias  # (S, S) broadcasts over (H*B, S, S)
    m = jnp.max(s, axis=-1, keepdims=True)
    e = jnp.exp(s - m)
    p = e * pl.reciprocal(jnp.sum(e, axis=-1, keepdims=True), approx=True)
    ctx = jnp.einsum("nqk,nkd->nqd", p, vh, preferred_element_type=jnp.float32)
    # (H*B, S, DK) -> (BS, D): leading-dim slices + one lane concat, then one
    # (BS, D) @ (D, D) output projection.
    ctx_all = jnp.concatenate(
        [ctx[h * B:(h + 1) * B].reshape(BS, DK) for h in range(H)], axis=-1)
    return jnp.dot(ctx_all, wo, preferred_element_type=jnp.float32) + bo


# ---------------------------------------------------------------------------
# Fused decoder-block kernel (whole batch, single grid step, 5 input DMAs).
# ---------------------------------------------------------------------------
def decoder_block_kernel(x_ref, y_ref, bias_ref, w_ref, vec_ref, out_ref):
    x = x_ref[...]        # (B*S, D)
    y = y_ref[...]        # (B*S, D)
    bias = bias_ref[...]  # (S, S) additive mask bias (precomputed in wrapper)

    # Static slices of the two packed parameter slabs (zero extra DMAs).
    mqkv_w = w_ref[:, _C_MQKV:_C_MQKV + 3 * D]
    mo_w = w_ref[:, _C_MO:_C_MO + D]
    cqk_w = w_ref[:, _C_CQK:_C_CQK + 2 * D]
    cv_w = w_ref[:, _C_CV:_C_CV + D]
    co_w = w_ref[:, _C_CO:_C_CO + D]
    f1_w = w_ref[:, _C_F1:_C_F1 + DFF]
    f2a_w = w_ref[:, _C_F2A:_C_F2A + D]
    f2b_w = w_ref[:, _C_F2B:_C_F2B + D]

    mqkv_b = vec_ref[_R_MQKVB:_R_MQKVB + 1, :3 * D]
    cqk_b = vec_ref[_R_CQKB:_R_CQKB + 1, :2 * D]
    mo_b = vec_ref[_R_MOB:_R_MOB + 1, :D]
    cv_b = vec_ref[_R_CVB:_R_CVB + 1, :D]
    co_b = vec_ref[_R_COB:_R_COB + 1, :D]
    f1_b = vec_ref[_R_F1B:_R_F1B + 1, :DFF]
    f2_b = vec_ref[_R_F2B_ROW:_R_F2B_ROW + 1, :D]
    g0, beta0 = vec_ref[_R_G0:_R_G0 + 1, :D], vec_ref[_R_B0:_R_B0 + 1, :D]
    g1, beta1 = vec_ref[_R_G1:_R_G1 + 1, :D], vec_ref[_R_B1:_R_B1 + 1, :D]
    g2, beta2 = vec_ref[_R_G2:_R_G2 + 1, :D], vec_ref[_R_B2:_R_B2 + 1, :D]

    # --- Residual 0: x + SelfAttn(LN0(x), LN0(x), LN0(x), tgt_mask) ----------
    n0 = _layernorm(x, g0, beta0)
    qkv = jnp.dot(n0, mqkv_w, preferred_element_type=jnp.float32) + mqkv_b
    x1 = x + _mh_attention(qkv[:, :D], qkv[:, D:2 * D], qkv[:, 2 * D:],
                           mo_w, mo_b, bias)

    # --- Residual 1: x1 + CrossAttn(q=y, k=y, v=LN1(x1)), no mask ------------
    n1 = _layernorm(x1, g1, beta1)
    qk = jnp.dot(y, cqk_w, preferred_element_type=jnp.float32) + cqk_b
    cv = jnp.dot(n1, cv_w, preferred_element_type=jnp.float32) + cv_b
    x2 = x1 + _mh_attention(qk[:, :D], qk[:, D:], cv, co_w, co_b, None)

    # --- Residual 2: x2 + FFN(LN2(x2)) ----------------------------------------
    n2 = _layernorm(x2, g2, beta2)
    hdn = jnp.maximum(
        jnp.dot(n2, f1_w, preferred_element_type=jnp.float32) + f1_b, 0.0)
    ff = (jnp.dot(hdn[:, :D], f2a_w, preferred_element_type=jnp.float32)
          + jnp.dot(hdn[:, D:], f2b_w, preferred_element_type=jnp.float32)
          + f2_b)
    out_ref[...] = (x2 + ff).astype(out_ref.dtype)
    # TODO(synk): train-mode dropout inside ResidualBlock / MHA / FFL is not
    # implemented (identity, eval-mode semantics).


# ---------------------------------------------------------------------------
# One-time parameter packing (hoisted out of the per-call path).
# ---------------------------------------------------------------------------
def pack_decoder_params(params):
    (mqw, mqb, mkw, mkb, mvw, mvb, mow, mob,
     cqw, cqb, ckw, ckb, cvw, cvb, cow, cob,
     f1w, f1b, f2w, f2b, g0, b0, g1, b1, g2, b2) = params
    scale = 1.0 / math.sqrt(DK)

    # Weight slab (D, 12*D): attention scale folded into the q columns.
    w_slab = jnp.concatenate(
        [mqw * scale, mkw, mvw, mow,
         cqw * scale, ckw, cvw, cow,
         f1w, f2w[:D], f2w[D:]], axis=1).astype(jnp.float32)
    assert w_slab.shape == (D, W_COLS)

    def row(*vs):
        v = jnp.concatenate([u.reshape(-1) for u in vs])
        return jnp.pad(v, (0, VEC_W - v.shape[0]))

    # Vector slab (13, 3*D): biases (q biases pre-scaled) + LayerNorm params.
    vec_slab = jnp.stack([
        row(mqb * scale, mkb, mvb),   # mqkv_b
        row(cqb * scale, ckb),        # cqk_b
        row(mob), row(cvb), row(cob),
        row(f1b), row(f2b),
        row(g0), row(b0), row(g1), row(b1), row(g2), row(b2)],
        axis=0).astype(jnp.float32)
    assert vec_slab.shape == (VEC_ROWS, VEC_W)
    return w_slab, vec_slab


@jax.jit
def decoder_block(x, y, mask, w_slab, vec_slab):
    """x, y: (B, S, D); mask: (1, S, S) float mask (nonzero = attend)."""
    # Additive mask bias computed once per call in XLA (kernel sees no compares).
    mask_bias = jnp.where(mask[0] == 0, jnp.float32(-1e9), jnp.float32(0.0))
    out = pl.pallas_call(
        decoder_block_kernel,
        out_shape=jax.ShapeDtypeStruct((BS, D), x.dtype),
        in_specs=[pl.BlockSpec(memory_space=pltpu.MemorySpace.VMEM)] * 5,
        out_specs=pl.BlockSpec(memory_space=pltpu.MemorySpace.VMEM),
    )(x.reshape(BS, D), y.reshape(BS, D), mask_bias, w_slab, vec_slab)
    return out.reshape(B, S, D)


# ---------------------------------------------------------------------------
# Pure-JAX reference (same math, batched) for correctness checking.
# ---------------------------------------------------------------------------
def ref_decoder(x, y, mask, params):
    (mqw, mqb, mkw, mkb, mvw, mvb, mow, mob,
     cqw, cqb, ckw, ckb, cvw, cvb, cow, cob,
     f1w, f1b, f2w, f2b, g0, b0, g1, b1, g2, b2) = params

    def ln(v, g, b):
        mu = v.mean(-1, keepdims=True)
        var = ((v - mu) ** 2).mean(-1, keepdims=True)
        return (v - mu) / jnp.sqrt(var + EPS) * g[0] + b[0]

    def attn(qi, ki, vi, wq, bq, wk, bk, wv, bv, wo, bo, m):
        q = (qi @ wq + bq[0]).reshape(qi.shape[0], -1, H, DK).transpose(0, 2, 1, 3)
        k = (ki @ wk + bk[0]).reshape(ki.shape[0], -1, H, DK).transpose(0, 2, 1, 3)
        v = (vi @ wv + bv[0]).reshape(vi.shape[0], -1, H, DK).transpose(0, 2, 1, 3)
        s = jnp.einsum("bhqd,bhkd->bhqk", q, k) / math.sqrt(DK)
        if m is not None:
            s = jnp.where(m[:, None] == 0.0, -1e9, s)
        p = jax.nn.softmax(s, axis=-1)
        o = jnp.einsum("bhqk,bhkd->bhqd", p, v).transpose(0, 2, 1, 3)
        o = o.reshape(qi.shape[0], -1, D)
        return o @ wo + bo[0]

    x1 = x + attn(ln(x, g0, b0), ln(x, g0, b0), ln(x, g0, b0),
                  mqw, mqb, mkw, mkb, mvw, mvb, mow, mob, mask)
    x2 = x1 + attn(y, y, ln(x1, g1, b1),
                   cqw, cqb, ckw, ckb, cvw, cvb, cow, cob, None)
    n2 = ln(x2, g2, b2)
    ff = jnp.maximum(n2 @ f1w + f1b[0], 0.0) @ f2w + f2b[0]
    return x2 + ff


# ---------------------------------------------------------------------------
# Deterministic parameter init + run.
# ---------------------------------------------------------------------------
def _init_linear(key, din, dout):
    k1, k2 = jax.random.split(key)
    bound = 1.0 / math.sqrt(din)
    w = jax.random.uniform(k1, (din, dout), jnp.float32, -bound, bound)
    b = jax.random.uniform(k2, (1, dout), jnp.float32, -bound, bound)
    return w, b


if __name__ == "__main__":
    key = jax.random.PRNGKey(0)
    keys = jax.random.split(key, 16)

    params = []
    # mha: q, k, v, o
    for i in range(4):
        params.extend(_init_linear(keys[i], D, D))
    # ca: q, k, v, o
    for i in range(4, 8):
        params.extend(_init_linear(keys[i], D, D))
    # ffl
    params.extend(_init_linear(keys[8], D, DFF))
    params.extend(_init_linear(keys[9], DFF, D))
    # 3 layernorms (gamma=1, beta=0)
    for _ in range(3):
        params.append(jnp.ones((1, D), jnp.float32))
        params.append(jnp.zeros((1, D), jnp.float32))

    x = jax.random.normal(keys[10], (B, S, D), jnp.float32)
    y = jax.random.normal(keys[11], (B, S, D), jnp.float32)
    tgt_mask = jnp.tril(jnp.ones((S, S), jnp.float32))[None]  # (1, S, S) causal

    # One-time packing (NOT in the per-call path).
    w_slab, vec_slab = pack_decoder_params(params)

    out = decoder_block(x, y, tgt_mask, w_slab, vec_slab)
    out = jax.block_until_ready(out)

    ref = ref_decoder(x, y, tgt_mask, params)
    assert out.shape == (B, S, D)
    assert jnp.allclose(out, ref, atol=2e-2, rtol=2e-2), "mismatch vs JAX reference"

    print("KERNEL_OK")
</pallas_src>

<mosaic_0001>
module attributes {stable_mosaic.version = 11 : i64} {
  func.func @decoder_block_kernel(%arg0: memref<16x32xf32, #tpu.memory_space<vmem>>, %arg1: memref<16x32xf32, #tpu.memory_space<vmem>>, %arg2: memref<8x8xf32, #tpu.memory_space<vmem>>, %arg3: memref<32x384xf32, #tpu.memory_space<vmem>>, %arg4: memref<13x96xf32, #tpu.memory_space<vmem>>, %arg5: memref<16x32xf32, #tpu.memory_space<vmem>>) attributes {dimension_semantics = [], scalar_prefetch = 0 : i64, scratch_operands = 0 : i64, tpu.core_type = #tpu.core_type<tc>} {
    %c0 = arith.constant 0 : index
    %c0_0 = arith.constant 0 : index
    %0 = vector.load %arg0[%c0, %c0_0] : memref<16x32xf32, #tpu.memory_space<vmem>>, vector<16x32xf32>
    %c0_1 = arith.constant 0 : index
    %c0_2 = arith.constant 0 : index
    %1 = vector.load %arg1[%c0_1, %c0_2] : memref<16x32xf32, #tpu.memory_space<vmem>>, vector<16x32xf32>
    %c0_3 = arith.constant 0 : index
    %c0_4 = arith.constant 0 : index
    %2 = vector.load %arg2[%c0_3, %c0_4] : memref<8x8xf32, #tpu.memory_space<vmem>>, vector<8x8xf32>
    %c0_5 = arith.constant 0 : index
    %c0_6 = arith.constant 0 : index
    %3 = vector.load %arg3[%c0_5, %c0_6] : memref<32x384xf32, #tpu.memory_space<vmem>>, vector<32x96xf32>
    %c0_7 = arith.constant 0 : index
    %c96 = arith.constant 96 : index
    %4 = vector.load %arg3[%c0_7, %c96] : memref<32x384xf32, #tpu.memory_space<vmem>>, vector<32x32xf32>
    %c0_8 = arith.constant 0 : index
    %c128 = arith.constant 128 : index
    %5 = vector.load %arg3[%c0_8, %c128] : memref<32x384xf32, #tpu.memory_space<vmem>>, vector<32x64xf32>
    %c0_9 = arith.constant 0 : index
    %c192 = arith.constant 192 : index
    %6 = vector.load %arg3[%c0_9, %c192] : memref<32x384xf32, #tpu.memory_space<vmem>>, vector<32x32xf32>
    %c0_10 = arith.constant 0 : index
    %c224 = arith.constant 224 : index
    %7 = vector.load %arg3[%c0_10, %c224] : memref<32x384xf32, #tpu.memory_space<vmem>>, vector<32x32xf32>
    %c0_11 = arith.constant 0 : index
    %c256 = arith.constant 256 : index
    %8 = vector.load %arg3[%c0_11, %c256] : memref<32x384xf32, #tpu.memory_space<vmem>>, vector<32x64xf32>
    %c0_12 = arith.constant 0 : index
    %c320 = arith.constant 320 : index
    %9 = vector.load %arg3[%c0_12, %c320] : memref<32x384xf32, #tpu.memory_space<vmem>>, vector<32x32xf32>
    %c0_13 = arith.constant 0 : index
    %c352 = arith.constant 352 : index
    %10 = vector.load %arg3[%c0_13, %c352] : memref<32x384xf32, #tpu.memory_space<vmem>>, vector<32x32xf32>
    %c0_14 = arith.constant 0 : index
    %c0_15 = arith.constant 0 : index
    %11 = vector.load %arg4[%c0_14, %c0_15] : memref<13x96xf32, #tpu.memory_space<vmem>>, vector<1x96xf32>
    %c1 = arith.constant 1 : index
    %c0_16 = arith.constant 0 : index
    %12 = vector.load %arg4[%c1, %c0_16] : memref<13x96xf32, #tpu.memory_space<vmem>>, vector<1x64xf32>
    %c2 = arith.constant 2 : index
    %c0_17 = arith.constant 0 : index
    %13 = vector.load %arg4[%c2, %c0_17] : memref<13x96xf32, #tpu.memory_space<vmem>>, vector<1x32xf32>
    %c3 = arith.constant 3 : index
    %c0_18 = arith.constant 0 : index
    %14 = vector.load %arg4[%c3, %c0_18] : memref<13x96xf32, #tpu.memory_space<vmem>>, vector<1x32xf32>
    %c4 = arith.constant 4 : index
    %c0_19 = arith.constant 0 : index
    %15 = vector.load %arg4[%c4, %c0_19] : memref<13x96xf32, #tpu.memory_space<vmem>>, vector<1x32xf32>
    %c5 = arith.constant 5 : index
    %c0_20 = arith.constant 0 : index
    %16 = vector.load %arg4[%c5, %c0_20] : memref<13x96xf32, #tpu.memory_space<vmem>>, vector<1x64xf32>
    %c6 = arith.constant 6 : index
    %c0_21 = arith.constant 0 : index
    %17 = vector.load %arg4[%c6, %c0_21] : memref<13x96xf32, #tpu.memory_space<vmem>>, vector<1x32xf32>
    %c7 = arith.constant 7 : index
    %c0_22 = arith.constant 0 : index
    %18 = vector.load %arg4[%c7, %c0_22] : memref<13x96xf32, #tpu.memory_space<vmem>>, vector<1x32xf32>
    %c8 = arith.constant 8 : index
    %c0_23 = arith.constant 0 : index
    %19 = vector.load %arg4[%c8, %c0_23] : memref<13x96xf32, #tpu.memory_space<vmem>>, vector<1x32xf32>
    %c9 = arith.constant 9 : index
    %c0_24 = arith.constant 0 : index
    %20 = vector.load %arg4[%c9, %c0_24] : memref<13x96xf32, #tpu.memory_space<vmem>>, vector<1x32xf32>
    %c10 = arith.constant 10 : index
    %c0_25 = arith.constant 0 : index
    %21 = vector.load %arg4[%c10, %c0_25] : memref<13x96xf32, #tpu.memory_space<vmem>>, vector<1x32xf32>
    %c11 = arith.constant 11 : index
    %c0_26 = arith.constant 0 : index
    %22 = vector.load %arg4[%c11, %c0_26] : memref<13x96xf32, #tpu.memory_space<vmem>>, vector<1x32xf32>
    %c12 = arith.constant 12 : index
    %c0_27 = arith.constant 0 : index
    %23 = vector.load %arg4[%c12, %c0_27] : memref<13x96xf32, #tpu.memory_space<vmem>>, vector<1x32xf32>
    %cst = arith.constant dense<0.000000e+00> : vector<16xf32>
    %24 = vector.multi_reduction <add>, %0, %cst [1] : vector<16x32xf32> to vector<16xf32>
    %25 = vector.shape_cast %24 : vector<16xf32> to vector<16x1xf32>
    %cst_28 = arith.constant 3.200000e+01 : f32
    %26 = vector.broadcast %cst_28 : f32 to vector<16x1xf32>
    %27 = arith.divf %25, %26 : vector<16x1xf32>
    %28 = vector.broadcast %27 : vector<16x1xf32> to vector<16x32xf32>
    %29 = arith.subf %0, %28 : vector<16x32xf32>
    %30 = arith.mulf %29, %29 : vector<16x32xf32>
    %cst_29 = arith.constant dense<0.000000e+00> : vector<16xf32>
    %31 = vector.multi_reduction <add>, %30, %cst_29 [1] : vector<16x32xf32> to vector<16xf32>
    %32 = vector.shape_cast %31 : vector<16xf32> to vector<16x1xf32>
    %cst_30 = arith.constant 3.200000e+01 : f32
    %33 = vector.broadcast %cst_30 : f32 to vector<16x1xf32>
    %34 = arith.divf %32, %33 : vector<16x1xf32>
    %35 = vector.broadcast %27 : vector<16x1xf32> to vector<16x32xf32>
    %36 = arith.subf %0, %35 : vector<16x32xf32>
    %cst_31 = arith.constant 9.99999974E-6 : f32
    %37 = vector.broadcast %cst_31 : f32 to vector<16x1xf32>
    %38 = arith.addf %34, %37 : vector<16x1xf32>
    %39 = math.rsqrt %38 : vector<16x1xf32>
    %40 = vector.broadcast %39 : vector<16x1xf32> to vector<16x32xf32>
    %41 = arith.mulf %36, %40 : vector<16x32xf32>
    %42 = vector.broadcast %18 : vector<1x32xf32> to vector<16x32xf32>
    %43 = arith.mulf %41, %42 : vector<16x32xf32>
    %44 = vector.broadcast %19 : vector<1x32xf32> to vector<16x32xf32>
    %45 = arith.addf %43, %44 : vector<16x32xf32>
    %cst_32 = arith.constant dense<0.000000e+00> : vector<16x96xf32>
    %46 = tpu.matmul %45, %3, %cst_32 {dimension_numbers = #tpu.dot_dimension_numbers<[1], [0], [0], [1], [0, 0, 1, 1], [], []>} : vector<16x32xf32>, vector<32x96xf32>, vector<16x96xf32> -> vector<16x96xf32>
    %47 = vector.broadcast %11 : vector<1x96xf32> to vector<16x96xf32>
    %48 = arith.addf %46, %47 : vector<16x96xf32>
    %49 = vector.extract_strided_slice %48 {offsets = [0, 0], sizes = [16, 32], strides = [1, 1]} : vector<16x96xf32> to vector<16x32xf32>
    %50 = vector.extract_strided_slice %48 {offsets = [0, 32], sizes = [16, 32], strides = [1, 1]} : vector<16x96xf32> to vector<16x32xf32>
    %51 = vector.extract_strided_slice %48 {offsets = [0, 64], sizes = [16, 32], strides = [1, 1]} : vector<16x96xf32> to vector<16x32xf32>
    %52 = vector.extract_strided_slice %49 {offsets = [0, 0], sizes = [16, 8], strides = [1, 1]} : vector<16x32xf32> to vector<16x8xf32>
    %53 = vector.shape_cast %52 : vector<16x8xf32> to vector<2x8x8xf32>
    %54 = vector.extract_strided_slice %49 {offsets = [0, 8], sizes = [16, 8], strides = [1, 1]} : vector<16x32xf32> to vector<16x8xf32>
    %55 = vector.shape_cast %54 : vector<16x8xf32> to vector<2x8x8xf32>
    %56 = vector.extract_strided_slice %49 {offsets = [0, 16], sizes = [16, 8], strides = [1, 1]} : vector<16x32xf32> to vector<16x8xf32>
    %57 = vector.shape_cast %56 : vector<16x8xf32> to vector<2x8x8xf32>
    %58 = vector.extract_strided_slice %49 {offsets = [0, 24], sizes = [16, 8], strides = [1, 1]} : vector<16x32xf32> to vector<16x8xf32>
    %59 = vector.shape_cast %58 : vector<16x8xf32> to vector<2x8x8xf32>
    %60 = tpu.concatenate %53, %55, %57, %59 in 0 : vector<2x8x8xf32>, vector<2x8x8xf32>, vector<2x8x8xf32>, vector<2x8x8xf32> -> vector<8x8x8xf32>
    %61 = vector.extract_strided_slice %50 {offsets = [0, 0], sizes = [16, 8], strides = [1, 1]} : vector<16x32xf32> to vector<16x8xf32>
    %62 = vector.shape_cast %61 : vector<16x8xf32> to vector<2x8x8xf32>
    %63 = vector.extract_strided_slice %50 {offsets = [0, 8], sizes = [16, 8], strides = [1, 1]} : vector<16x32xf32> to vector<16x8xf32>
    %64 = vector.shape_cast %63 : vector<16x8xf32> to vector<2x8x8xf32>
    %65 = vector.extract_strided_slice %50 {offsets = [0, 16], sizes = [16, 8], strides = [1, 1]} : vector<16x32xf32> to vector<16x8xf32>
    %66 = vector.shape_cast %65 : vector<16x8xf32> to vector<2x8x8xf32>
    %67 = vector.extract_strided_slice %50 {offsets = [0, 24], sizes = [16, 8], strides = [1, 1]} : vector<16x32xf32> to vector<16x8xf32>
    %68 = vector.shape_cast %67 : vector<16x8xf32> to vector<2x8x8xf32>
    %69 = tpu.concatenate %62, %64, %66, %68 in 0 : vector<2x8x8xf32>, vector<2x8x8xf32>, vector<2x8x8xf32>, vector<2x8x8xf32> -> vector<8x8x8xf32>
    %70 = vector.extract_strided_slice %51 {offsets = [0, 0], sizes = [16, 8], strides = [1, 1]} : vector<16x32xf32> to vector<16x8xf32>
    %71 = vector.shape_cast %70 : vector<16x8xf32> to vector<2x8x8xf32>
    %72 = vector.extract_strided_slice %51 {offsets = [0, 8], sizes = [16, 8], strides = [1, 1]} : vector<16x32xf32> to vector<16x8xf32>
    %73 = vector.shape_cast %72 : vector<16x8xf32> to vector<2x8x8xf32>
    %74 = vector.extract_strided_slice %51 {offsets = [0, 16], sizes = [16, 8], strides = [1, 1]} : vector<16x32xf32> to vector<16x8xf32>
    %75 = vector.shape_cast %74 : vector<16x8xf32> to vector<2x8x8xf32>
    %76 = vector.extract_strided_slice %51 {offsets = [0, 24], sizes = [16, 8], strides = [1, 1]} : vector<16x32xf32> to vector<16x8xf32>
    %77 = vector.shape_cast %76 : vector<16x8xf32> to vector<2x8x8xf32>
    %78 = tpu.concatenate %71, %73, %75, %77 in 0 : vector<2x8x8xf32>, vector<2x8x8xf32>, vector<2x8x8xf32>, vector<2x8x8xf32> -> vector<8x8x8xf32>
    "tpu.trace_start"() <{level = 10 : i32, message = "nqd,nkd->nqk"}> : () -> ()
    %cst_33 = arith.constant dense<0.000000e+00> : vector<8x8x8xf32>
    %79 = tpu.matmul %60, %69, %cst_33 {dimension_numbers = #tpu.dot_dimension_numbers<[2], [2], [1], [1], [0, 0, 0, 1, 1, 1], [0], [0]>} : vector<8x8x8xf32>, vector<8x8x8xf32>, vector<8x8x8xf32> -> vector<8x8x8xf32>
    "tpu.trace_stop"() : () -> ()
    %80 = vector.shape_cast %2 : vector<8x8xf32> to vector<1x8x8xf32>
    %81 = vector.broadcast %80 : vector<1x8x8xf32> to vector<8x8x8xf32>
    %82 = arith.addf %79, %81 : vector<8x8x8xf32>
    %cst_34 = arith.constant dense<0xFF800000> : vector<8x8xf32>
    %83 = vector.multi_reduction <maximumf>, %82, %cst_34 [2] : vector<8x8x8xf32> to vector<8x8xf32>
    %84 = vector.shape_cast %83 : vector<8x8xf32> to vector<8x8x1xf32>
    %85 = vector.broadcast %84 : vector<8x8x1xf32> to vector<8x8x8xf32>
    %86 = arith.subf %82, %85 : vector<8x8x8xf32>
    %87 = math.exp %86 : vector<8x8x8xf32>
    %cst_35 = arith.constant dense<0.000000e+00> : vector<8x8xf32>
    %88 = vector.multi_reduction <add>, %87, %cst_35 [2] : vector<8x8x8xf32> to vector<8x8xf32>
    %89 = vector.shape_cast %88 : vector<8x8xf32> to vector<8x8x1xf32>
    %90 = tpu.reciprocal %89 {approx = true} : vector<8x8x1xf32> -> vector<8x8x1xf32>
    %91 = vector.broadcast %90 : vector<8x8x1xf32> to vector<8x8x8xf32>
    %92 = arith.mulf %87, %91 : vector<8x8x8xf32>
    "tpu.trace_start"() <{level = 10 : i32, message = "nqk,nkd->nqd"}> : () -> ()
    %cst_36 = arith.constant dense<0.000000e+00> : vector<8x8x8xf32>
    %93 = tpu.matmul %92, %78, %cst_36 {dimension_numbers = #tpu.dot_dimension_numbers<[2], [1], [1], [2], [0, 0, 0, 1, 1, 2], [0], [0]>} : vector<8x8x8xf32>, vector<8x8x8xf32>, vector<8x8x8xf32> -> vector<8x8x8xf32>
    "tpu.trace_stop"() : () -> ()
    %94 = vector.extract_strided_slice %93 {offsets = [0, 0, 0], sizes = [2, 8, 8], strides = [1, 1, 1]} : vector<8x8x8xf32> to vector<2x8x8xf32>
    %95 = vector.shape_cast %94 : vector<2x8x8xf32> to vector<16x8xf32>
    %96 = vector.extract_strided_slice %93 {offsets = [2, 0, 0], sizes = [2, 8, 8], strides = [1, 1, 1]} : vector<8x8x8xf32> to vector<2x8x8xf32>
    %97 = vector.shape_cast %96 : vector<2x8x8xf32> to vector<16x8xf32>
    %98 = vector.extract_strided_slice %93 {offsets = [4, 0, 0], sizes = [2, 8, 8], strides = [1, 1, 1]} : vector<8x8x8xf32> to vector<2x8x8xf32>
    %99 = vector.shape_cast %98 : vector<2x8x8xf32> to vector<16x8xf32>
    %100 = vector.extract_strided_slice %93 {offsets = [6, 0, 0], sizes = [2, 8, 8], strides = [1, 1, 1]} : vector<8x8x8xf32> to vector<2x8x8xf32>
    %101 = vector.shape_cast %100 : vector<2x8x8xf32> to vector<16x8xf32>
    %102 = tpu.concatenate %95, %97, %99, %101 in 1 : vector<16x8xf32>, vector<16x8xf32>, vector<16x8xf32>, vector<16x8xf32> -> vector<16x32xf32>
    %cst_37 = arith.constant dense<0.000000e+00> : vector<16x32xf32>
    %103 = tpu.matmul %102, %4, %cst_37 {dimension_numbers = #tpu.dot_dimension_numbers<[1], [0], [0], [1], [0, 0, 1, 1], [], []>} : vector<16x32xf32>, vector<32x32xf32>, vector<16x32xf32> -> vector<16x32xf32>
    %104 = vector.broadcast %13 : vector<1x32xf32> to vector<16x32xf32>
    %105 = arith.addf %103, %104 : vector<16x32xf32>
    %106 = arith.addf %0, %105 : vector<16x32xf32>
    %cst_38 = arith.constant dense<0.000000e+00> : vector<16xf32>
    %107 = vector.multi_reduction <add>, %106, %cst_38 [1] : vector<16x32xf32> to vector<16xf32>
    %108 = vector.shape_cast %107 : vector<16xf32> to vector<16x1xf32>
    %cst_39 = arith.constant 3.200000e+01 : f32
    %109 = vector.broadcast %cst_39 : f32 to vector<16x1xf32>
    %110 = arith.divf %108, %109 : vector<16x1xf32>
    %111 = vector.broadcast %110 : vector<16x1xf32> to vector<16x32xf32>
    %112 = arith.subf %106, %111 : vector<16x32xf32>
    %113 = arith.mulf %112, %112 : vector<16x32xf32>
    %cst_40 = arith.constant dense<0.000000e+00> : vector<16xf32>
    %114 = vector.multi_reduction <add>, %113, %cst_40 [1] : vector<16x32xf32> to vector<16xf32>
    %115 = vector.shape_cast %114 : vector<16xf32> to vector<16x1xf32>
    %cst_41 = arith.constant 3.200000e+01 : f32
    %116 = vector.broadcast %cst_41 : f32 to vector<16x1xf32>
    %117 = arith.divf %115, %116 : vector<16x1xf32>
    %118 = vector.broadcast %110 : vector<16x1xf32> to vector<16x32xf32>
    %119 = arith.subf %106, %118 : vector<16x32xf32>
    %cst_42 = arith.constant 9.99999974E-6 : f32
    %120 = vector.broadcast %cst_42 : f32 to vector<16x1xf32>
    %121 = arith.addf %117, %120 : vector<16x1xf32>
    %122 = math.rsqrt %121 : vector<16x1xf32>
    %123 = vector.broadcast %122 : vector<16x1xf32> to vector<16x32xf32>
    %124 = arith.mulf %119, %123 : vector<16x32xf32>
    %125 = vector.broadcast %20 : vector<1x32xf32> to vector<16x32xf32>
    %126 = arith.mulf %124, %125 : vector<16x32xf32>
    %127 = vector.broadcast %21 : vector<1x32xf32> to vector<16x32xf32>
    %128 = arith.addf %126, %127 : vector<16x32xf32>
    %cst_43 = arith.constant dense<0.000000e+00> : vector<16x64xf32>
    %129 = tpu.matmul %1, %5, %cst_43 {dimension_numbers = #tpu.dot_dimension_numbers<[1], [0], [0], [1], [0, 0, 1, 1], [], []>} : vector<16x32xf32>, vector<32x64xf32>, vector<16x64xf32> -> vector<16x64xf32>
    %130 = vector.broadcast %12 : vector<1x64xf32> to vector<16x64xf32>
    %131 = arith.addf %129, %130 : vector<16x64xf32>
    %cst_44 = arith.constant dense<0.000000e+00> : vector<16x32xf32>
    %132 = tpu.matmul %128, %6, %cst_44 {dimension_numbers = #tpu.dot_dimension_numbers<[1], [0], [0], [1], [0, 0, 1, 1], [], []>} : vector<16x32xf32>, vector<32x32xf32>, vector<16x32xf32> -> vector<16x32xf32>
    %133 = vector.broadcast %14 : vector<1x32xf32> to vector<16x32xf32>
    %134 = arith.addf %132, %133 : vector<16x32xf32>
    %135 = vector.extract_strided_slice %131 {offsets = [0, 0], sizes = [16, 32], strides = [1, 1]} : vector<16x64xf32> to vector<16x32xf32>
    %136 = vector.extract_strided_slice %131 {offsets = [0, 32], sizes = [16, 32], strides = [1, 1]} : vector<16x64xf32> to vector<16x32xf32>
    %137 = vector.extract_strided_slice %135 {offsets = [0, 0], sizes = [16, 8], strides = [1, 1]} : vector<16x32xf32> to vector<16x8xf32>
    %138 = vector.shape_cast %137 : vector<16x8xf32> to vector<2x8x8xf32>
    %139 = vector.extract_strided_slice %135 {offsets = [0, 8], sizes = [16, 8], strides = [1, 1]} : vector<16x32xf32> to vector<16x8xf32>
    %140 = vector.shape_cast %139 : vector<16x8xf32> to vector<2x8x8xf32>
    %141 = vector.extract_strided_slice %135 {offsets = [0, 16], sizes = [16, 8], strides = [1, 1]} : vector<16x32xf32> to vector<16x8xf32>
    %142 = vector.shape_cast %141 : vector<16x8xf32> to vector<2x8x8xf32>
    %143 = vector.extract_strided_slice %135 {offsets = [0, 24], sizes = [16, 8], strides = [1, 1]} : vector<16x32xf32> to vector<16x8xf32>
    %144 = vector.shape_cast %143 : vector<16x8xf32> to vector<2x8x8xf32>
    %145 = tpu.concatenate %138, %140, %142, %144 in 0 : vector<2x8x8xf32>, vector<2x8x8xf32>, vector<2x8x8xf32>, vector<2x8x8xf32> -> vector<8x8x8xf32>
    %146 = vector.extract_strided_slice %136 {offsets = [0, 0], sizes = [16, 8], strides = [1, 1]} : vector<16x32xf32> to vector<16x8xf32>
    %147 = vector.shape_cast %146 : vector<16x8xf32> to vector<2x8x8xf32>
    %148 = vector.extract_strided_slice %136 {offsets = [0, 8], sizes = [16, 8], strides = [1, 1]} : vector<16x32xf32> to vector<16x8xf32>
    %149 = vector.shape_cast %148 : vector<16x8xf32> to vector<2x8x8xf32>
    %150 = vector.extract_strided_slice %136 {offsets = [0, 16], sizes = [16, 8], strides = [1, 1]} : vector<16x32xf32> to vector<16x8xf32>
    %151 = vector.shape_cast %150 : vector<16x8xf32> to vector<2x8x8xf32>
    %152 = vector.extract_strided_slice %136 {offsets = [0, 24], sizes = [16, 8], strides = [1, 1]} : vector<16x32xf32> to vector<16x8xf32>
    %153 = vector.shape_cast %152 : vector<16x8xf32> to vector<2x8x8xf32>
    %154 = tpu.concatenate %147, %149, %151, %153 in 0 : vector<2x8x8xf32>, vector<2x8x8xf32>, vector<2x8x8xf32>, vector<2x8x8xf32> -> vector<8x8x8xf32>
    %155 = vector.extract_strided_slice %134 {offsets = [0, 0], sizes = [16, 8], strides = [1, 1]} : vector<16x32xf32> to vector<16x8xf32>
    %156 = vector.shape_cast %155 : vector<16x8xf32> to vector<2x8x8xf32>
    %157 = vector.extract_strided_slice %134 {offsets = [0, 8], sizes = [16, 8], strides = [1, 1]} : vector<16x32xf32> to vector<16x8xf32>
    %158 = vector.shape_cast %157 : vector<16x8xf32> to vector<2x8x8xf32>
    %159 = vector.extract_strided_slice %134 {offsets = [0, 16], sizes = [16, 8], strides = [1, 1]} : vector<16x32xf32> to vector<16x8xf32>
    %160 = vector.shape_cast %159 : vector<16x8xf32> to vector<2x8x8xf32>
    %161 = vector.extract_strided_slice %134 {offsets = [0, 24], sizes = [16, 8], strides = [1, 1]} : vector<16x32xf32> to vector<16x8xf32>
    %162 = vector.shape_cast %161 : vector<16x8xf32> to vector<2x8x8xf32>
    %163 = tpu.concatenate %156, %158, %160, %162 in 0 : vector<2x8x8xf32>, vector<2x8x8xf32>, vector<2x8x8xf32>, vector<2x8x8xf32> -> vector<8x8x8xf32>
    "tpu.trace_start"() <{level = 10 : i32, message = "nqd,nkd->nqk"}> : () -> ()
    %cst_45 = arith.constant dense<0.000000e+00> : vector<8x8x8xf32>
    %164 = tpu.matmul %145, %154, %cst_45 {dimension_numbers = #tpu.dot_dimension_numbers<[2], [2], [1], [1], [0, 0, 0, 1, 1, 1], [0], [0]>} : vector<8x8x8xf32>, vector<8x8x8xf32>, vector<8x8x8xf32> -> vector<8x8x8xf32>
    "tpu.trace_stop"() : () -> ()
    %cst_46 = arith.constant dense<0xFF800000> : vector<8x8xf32>
    %165 = vector.multi_reduction <maximumf>, %164, %cst_46 [2] : vector<8x8x8xf32> to vector<8x8xf32>
    %166 = vector.shape_cast %165 : vector<8x8xf32> to vector<8x8x1xf32>
    %167 = vector.broadcast %166 : vector<8x8x1xf32> to vector<8x8x8xf32>
    %168 = arith.subf %164, %167 : vector<8x8x8xf32>
    %169 = math.exp %168 : vector<8x8x8xf32>
    %cst_47 = arith.constant dense<0.000000e+00> : vector<8x8xf32>
    %170 = vector.multi_reduction <add>, %169, %cst_47 [2] : vector<8x8x8xf32> to vector<8x8xf32>
    %171 = vector.shape_cast %170 : vector<8x8xf32> to vector<8x8x1xf32>
    %172 = tpu.reciprocal %171 {approx = true} : vector<8x8x1xf32> -> vector<8x8x1xf32>
    %173 = vector.broadcast %172 : vector<8x8x1xf32> to vector<8x8x8xf32>
    %174 = arith.mulf %169, %173 : vector<8x8x8xf32>
    "tpu.trace_start"() <{level = 10 : i32, message = "nqk,nkd->nqd"}> : () -> ()
    %cst_48 = arith.constant dense<0.000000e+00> : vector<8x8x8xf32>
    %175 = tpu.matmul %174, %163, %cst_48 {dimension_numbers = #tpu.dot_dimension_numbers<[2], [1], [1], [2], [0, 0, 0, 1, 1, 2], [0], [0]>} : vector<8x8x8xf32>, vector<8x8x8xf32>, vector<8x8x8xf32> -> vector<8x8x8xf32>
    "tpu.trace_stop"() : () -> ()
    %176 = vector.extract_strided_slice %175 {offsets = [0, 0, 0], sizes = [2, 8, 8], strides = [1, 1, 1]} : vector<8x8x8xf32> to vector<2x8x8xf32>
    %177 = vector.shape_cast %176 : vector<2x8x8xf32> to vector<16x8xf32>
    %178 = vector.extract_strided_slice %175 {offsets = [2, 0, 0], sizes = [2, 8, 8], strides = [1, 1, 1]} : vector<8x8x8xf32> to vector<2x8x8xf32>
    %179 = vector.shape_cast %178 : vector<2x8x8xf32> to vector<16x8xf32>
    %180 = vector.extract_strided_slice %175 {offsets = [4, 0, 0], sizes = [2, 8, 8], strides = [1, 1, 1]} : vector<8x8x8xf32> to vector<2x8x8xf32>
    %181 = vector.shape_cast %180 : vector<2x8x8xf32> to vector<16x8xf32>
    %182 = vector.extract_strided_slice %175 {offsets = [6, 0, 0], sizes = [2, 8, 8], strides = [1, 1, 1]} : vector<8x8x8xf32> to vector<2x8x8xf32>
    %183 = vector.shape_cast %182 : vector<2x8x8xf32> to vector<16x8xf32>
    %184 = tpu.concatenate %177, %179, %181, %183 in 1 : vector<16x8xf32>, vector<16x8xf32>, vector<16x8xf32>, vector<16x8xf32> -> vector<16x32xf32>
    %cst_49 = arith.constant dense<0.000000e+00> : vector<16x32xf32>
    %185 = tpu.matmul %184, %7, %cst_49 {dimension_numbers = #tpu.dot_dimension_numbers<[1], [0], [0], [1], [0, 0, 1, 1], [], []>} : vector<16x32xf32>, vector<32x32xf32>, vector<16x32xf32> -> vector<16x32xf32>
    %186 = vector.broadcast %15 : vector<1x32xf32> to vector<16x32xf32>
    %187 = arith.addf %185, %186 : vector<16x32xf32>
    %188 = arith.addf %106, %187 : vector<16x32xf32>
    %cst_50 = arith.constant dense<0.000000e+00> : vector<16xf32>
    %189 = vector.multi_reduction <add>, %188, %cst_50 [1] : vector<16x32xf32> to vector<16xf32>
    %190 = vector.shape_cast %189 : vector<16xf32> to vector<16x1xf32>
    %cst_51 = arith.constant 3.200000e+01 : f32
    %191 = vector.broadcast %cst_51 : f32 to vector<16x1xf32>
    %192 = arith.divf %190, %191 : vector<16x1xf32>
    %193 = vector.broadcast %192 : vector<16x1xf32> to vector<16x32xf32>
    %194 = arith.subf %188, %193 : vector<16x32xf32>
    %195 = arith.mulf %194, %194 : vector<16x32xf32>
    %cst_52 = arith.constant dense<0.000000e+00> : vector<16xf32>
    %196 = vector.multi_reduction <add>, %195, %cst_52 [1] : vector<16x32xf32> to vector<16xf32>
    %197 = vector.shape_cast %196 : vector<16xf32> to vector<16x1xf32>
    %cst_53 = arith.constant 3.200000e+01 : f32
    %198 = vector.broadcast %cst_53 : f32 to vector<16x1xf32>
    %199 = arith.divf %197, %198 : vector<16x1xf32>
    %200 = vector.broadcast %192 : vector<16x1xf32> to vector<16x32xf32>
    %201 = arith.subf %188, %200 : vector<16x32xf32>
    %cst_54 = arith.constant 9.99999974E-6 : f32
    %202 = vector.broadcast %cst_54 : f32 to vector<16x1xf32>
    %203 = arith.addf %199, %202 : vector<16x1xf32>
    %204 = math.rsqrt %203 : vector<16x1xf32>
    %205 = vector.broadcast %204 : vector<16x1xf32> to vector<16x32xf32>
    %206 = arith.mulf %201, %205 : vector<16x32xf32>
    %207 = vector.broadcast %22 : vector<1x32xf32> to vector<16x32xf32>
    %208 = arith.mulf %206, %207 : vector<16x32xf32>
    %209 = vector.broadcast %23 : vector<1x32xf32> to vector<16x32xf32>
    %210 = arith.addf %208, %209 : vector<16x32xf32>
    %cst_55 = arith.constant dense<0.000000e+00> : vector<16x64xf32>
    %211 = tpu.matmul %210, %8, %cst_55 {dimension_numbers = #tpu.dot_dimension_numbers<[1], [0], [0], [1], [0, 0, 1, 1], [], []>} : vector<16x32xf32>, vector<32x64xf32>, vector<16x64xf32> -> vector<16x64xf32>
    %212 = vector.broadcast %16 : vector<1x64xf32> to vector<16x64xf32>
    %213 = arith.addf %211, %212 : vector<16x64xf32>
    %cst_56 = arith.constant 0.000000e+00 : f32
    %214 = vector.broadcast %cst_56 : f32 to vector<16x64xf32>
    %215 = arith.maximumf %213, %214 : vector<16x64xf32>
    %216 = vector.extract_strided_slice %215 {offsets = [0, 0], sizes = [16, 32], strides = [1, 1]} : vector<16x64xf32> to vector<16x32xf32>
    %cst_57 = arith.constant dense<0.000000e+00> : vector<16x32xf32>
    %217 = tpu.matmul %216, %9, %cst_57 {dimension_numbers = #tpu.dot_dimension_numbers<[1], [0], [0], [1], [0, 0, 1, 1], [], []>} : vector<16x32xf32>, vector<32x32xf32>, vector<16x32xf32> -> vector<16x32xf32>
    %218 = vector.extract_strided_slice %215 {offsets = [0, 32], sizes = [16, 32], strides = [1, 1]} : vector<16x64xf32> to vector<16x32xf32>
    %cst_58 = arith.constant dense<0.000000e+00> : vector<16x32xf32>
    %219 = tpu.matmul %218, %10, %cst_58 {dimension_numbers = #tpu.dot_dimension_numbers<[1], [0], [0], [1], [0, 0, 1, 1], [], []>} : vector<16x32xf32>, vector<32x32xf32>, vector<16x32xf32> -> vector<16x32xf32>
    %220 = arith.addf %217, %219 : vector<16x32xf32>
    %221 = vector.broadcast %17 : vector<1x32xf32> to vector<16x32xf32>
    %222 = arith.addf %220, %221 : vector<16x32xf32>
    %223 = arith.addf %188, %222 : vector<16x32xf32>
    %c0_59 = arith.constant 0 : index
    %c0_60 = arith.constant 0 : index
    %224 = vector.load %arg5[%c0_59, %c0_60] : memref<16x32xf32, #tpu.memory_space<vmem>>, vector<16x32xf32>
    tpu.vector_store %arg5[%c0_59, %c0_60], %223 {strides = array<i32>} : memref<16x32xf32, #tpu.memory_space<vmem>>, vector<16x32xf32>,
    return
  }
}

</mosaic_0001>

<llo_original>
// kernel: decoder_block.1
$region0: #{decoder_block.1}
  #allocation0 [shape = 'u32[]', space=smem, size = 0x4, offset = 0x4, fixed_abs, tag = 'smem constant byte address 0x4 - core index']
  #allocation1 [shape = 'u32[72,128]{1,0:T(1,128)}', space=vmem, size = 0x9000, scoped, tag = 'internal scratch']
  %s0 = inlined_call_operand.vmem [shape: f32[16,32], index: 0, kind: input, shape index: {}]
  %s1 = inlined_call_operand.hbm [shape: f32[16,32], index: 1, kind: input, shape index: {}]
  %s2 = inlined_call_operand.vmem [shape: f32[8,8], index: 2, kind: input, shape index: {}]
  %s3 = inlined_call_operand.hbm [shape: f32[32,384], index: 3, kind: input, shape index: {}]
  %s4 = inlined_call_operand.hbm [shape: f32[13,96], index: 4, kind: input, shape index: {}]
  %s5 = inlined_call_operand.hbm [shape: f32[16,32], index: 5, kind: output, shape index: {}]
  %s6 = sld [smem:[#allocation0]]
  $region42: #{decoder_block.1} parent=0
    _
  %s8 = ssub.s32 1, %s6
  %s9 = scalar_select 0, %s8, %s6
  $region1: #{decoder_block.1} parent=0
    #allocation2 [shape = 'u8[8192]{0}', space=vmem, size = 0x2000, scoped, tag = 'input window, operand 1, single buffered']
    #allocation3 [shape = 's32[1]{0}', space=sflag, size = 0x4, scoped, tag = 'scoped memory for decoder_block.1']
    #allocation4 [shape = 's32[1]{0}', space=sflag, size = 0x4, scoped, tag = 'scoped memory for decoder_block.1']
    #allocation5 [shape = 'u8[49152]{0}', space=vmem, size = 0xc000, scoped, tag = 'input window, operand 3, single buffered']
    #allocation6 [shape = 's32[1]{0}', space=sflag, size = 0x4, scoped, tag = 'scoped memory for decoder_block.1']
    #allocation7 [shape = 'u8[8192]{0}', space=vmem, size = 0x2000, scoped, tag = 'input window, operand 4, single buffered']
    #allocation8 [shape = 'u8[8192]{0}', space=vmem, size = 0x2000, scoped, tag = 'output window, operand 0, single buffered']
    %10 = vsyncpa [#allocation3], 0
    %11 = vsyncpa [#allocation6], 0
    %12 = vsyncpa [#allocation4], 0
    // Predicated region
    $region2: #{decoder_block.1} parent=1 // pred_check
      _
    $region3: #{decoder_block.1} parent=1 // pred_check_branch
      %14 = sbr.rel (0) target = $region5
    $region4: #{decoder_block.1} parent=1 // pred_region
      _
    $region5: #{decoder_block.1} parent=1 // pred_fallthru
      _
    // Predicated region
    $region6: #{decoder_block.1} parent=1 // pred_check
      _
    $region7: #{decoder_block.1} parent=1 // pred_check_branch
      %16 = sbr.rel (0) target = $region9
    $region8: #{decoder_block.1} parent=1 // pred_region
      %18 = vsyncadd [#allocation3], 0
      %s19 = sshll.u32 %s1, 4
      %s20 = int_to_ptr.hbm [resolvable:$true] %s19
      %s21 = sshll.u32 [#allocation2], 4
      %s22 = int_to_ptr.vmem [resolvable:$true] %s21
      %27 = dma.hbm_to_vmem [thread:$0]  %s20, 256, %s22, [#allocation3], 128, 128, 8
    $region9: #{decoder_block.1} parent=1 // pred_fallthru
      _
    // Predicated region
    $region10: #{decoder_block.1} parent=1 // pred_check
      _
    $region11: #{decoder_block.1} parent=1 // pred_check_branch
      %29 = sbr.rel (0) target = $region13
    $region12: #{decoder_block.1} parent=1 // pred_region
      _
    $region13: #{decoder_block.1} parent=1 // pred_fallthru
      _
    // Predicated region
    $region14: #{decoder_block.1} parent=1 // pred_check
      _
    $region15: #{decoder_block.1} parent=1 // pred_check_branch
      %31 = sbr.rel (0) target = $region17
    $region16: #{decoder_block.1} parent=1 // pred_region
      %33 = vsyncadd [#allocation6], 0
      %s34 = sshll.u32 %s3, 4
      %s35 = int_to_ptr.hbm [resolvable:$true] %s34
      %s36 = sshll.u32 [#allocation5], 4
      %s37 = int_to_ptr.vmem [resolvable:$true] %s36
      %42 = dma.hbm_to_vmem [thread:$0]  %s35, 1536, %s37, [#allocation6], 384, 384, 24
    $region17: #{decoder_block.1} parent=1 // pred_fallthru
      _
    // Predicated region
    $region18: #{decoder_block.1} parent=1 // pred_check
      _
    $region19: #{decoder_block.1} parent=1 // pred_check_branch
      %44 = sbr.rel (0) target = $region21
    $region20: #{decoder_block.1} parent=1 // pred_region
      %46 = vsyncadd [#allocation6], 0
      %s47 = sshll.u32 %s4, 4
      %s48 = int_to_ptr.hbm [resolvable:$true] %s47
      %s49 = sshll.u32 [#allocation7], 4
      %s50 = int_to_ptr.vmem [resolvable:$true] %s49
      %55 = dma.hbm_to_vmem [thread:$0]  %s48, 256, %s50, [#allocation6], 128, 128, 8
    $region21: #{decoder_block.1} parent=1 // pred_fallthru
      _
    // Predicated region
    $region22: #{decoder_block.1} parent=1 // pred_check
      _
    $region23: #{decoder_block.1} parent=1 // pred_check_branch
      %57 = sbr.rel (0) target = $region25
    $region24: #{decoder_block.1} parent=1 // pred_region
      %59 = dma.done [#allocation3], 256
    $region25: #{decoder_block.1} parent=1 // pred_fallthru
      _
    // Predicated region
    $region26: #{decoder_block.1} parent=1 // pred_check
      _
    $region27: #{decoder_block.1} parent=1 // pred_check_branch
      %61 = sbr.rel (0) target = $region29
    $region28: #{decoder_block.1} parent=1 // pred_region
      %63 = dma.done [#allocation6], 1536
    $region29: #{decoder_block.1} parent=1 // pred_fallthru
      _
    // Predicated region
    $region30: #{decoder_block.1} parent=1 // pred_check
      _
    $region31: #{decoder_block.1} parent=1 // pred_check_branch
      %65 = sbr.rel (0) target = $region33
    $region32: #{decoder_block.1} parent=1 // pred_region
      %67 = dma.done [#allocation6], 256
    $region33: #{decoder_block.1} parent=1 // pred_fallthru
      _
    %v68 = vld [vmem:[%s0] sm:$0xff]
    %v69 = vld [vmem:[%s0 + $0x8] sm:$0xff]
    %v70 = vld [vmem:[#allocation2] sm:$0xff]
    %v71 = vld [vmem:[#allocation2 + $0x8] sm:$0xff]
    %v72 = vld [vmem:[%s2] sm:$0xff]
    %v73 = vld [vmem:[#allocation5] sm:$0xff]
    %v74 = vld [vmem:[#allocation5 + $0x18] sm:$0xff]
    %v75 = vld [vmem:[#allocation5 + $0x30] sm:$0xff]
    %v76 = vld [vmem:[#allocation5 + $0x48] sm:$0xff]
    %v77 = vld [vmem:[#allocation5 + $0x8] sm:$0xff]
    %v78 = vld [vmem:[#allocation5 + $0x20] sm:$0xff]
    %v79 = vld [vmem:[#allocation5 + $0x38] sm:$0xff]
    %v80 = vld [vmem:[#allocation5 + $0x50] sm:$0xff]
    %v81 = vld [vmem:[#allocation5 + $0x10] sm:$0xff]
    %v82 = vld [vmem:[#allocation5 + $0x28] sm:$0xff]
    %v83 = vld [vmem:[#allocation5 + $0x40] sm:$0xff]
    %v84 = vld [vmem:[#allocation5 + $0x58] sm:$0xff]
    %v85 = vld [vmem:[#allocation7] sm:$0x1]
    %v86 = vld [vmem:[#allocation7 + $0x1] sm:$0x1]
    %v87 = vld [vmem:[#allocation7 + $0x2] sm:$0x1]
    %v88 = vld [vmem:[#allocation7 + $0x3] sm:$0x1]
    %v89 = vld [vmem:[#allocation7 + $0x4] sm:$0x1]
    %v90 = vld [vmem:[#allocation7 + $0x5] sm:$0x1]
    %v91 = vld [vmem:[#allocation7 + $0x6] sm:$0x1]
    %v92 = vld [vmem:[#allocation7 + $0x7] sm:$0x1]
    %v93 = vld [vmem:[#allocation7 + $0x8] sm:$0x1]
    %v94 = vld [vmem:[#allocation7 + $0x9] sm:$0x1]
    %v95 = vld [vmem:[#allocation7 + $0xa] sm:$0x1]
    %v96 = vld [vmem:[#allocation7 + $0xb] sm:$0x1]
    %v97 = vld [vmem:[#allocation7 + $0xc] sm:$0x1]
    %vm98 = vcmask 261120
    %v99 = vsel %vm98, %v68, 0.0
    %100 = vadd.xlane.f32.xlu0 %v99
    %v101 = vpop.xlane.xlu0 %100
    %v102 = vsel %vm98, %v69, 0.0
    %103 = vadd.xlane.f32.xlu0 %v102
    %v104 = vpop.xlane.xlu0 %103
    %v105 = vrcp.pop 32.0
    %v106 = vmul.f32 32.0, %v105
    %v107 = vsub.f32 1.0, %v106
    %v108 = vmul.f32 %v105, %v107
    %v109 = vadd.f32 %v105, %v108
    %vm110 = vweird.f32 %v105
    %v111 = vsel %vm110, %v105, %v109
    %v112 = vmul.f32 %v101, %v111
    %v113 = vmul.f32 %v104, %v111
    %v114 = vsub.f32 %v68, %v112
    %v115 = vsub.f32 %v69, %v113
    %v116 = vmul.f32 %v114, %v114
    %v117 = vmul.f32 %v115, %v115
    %v118 = vsel %vm98, %v116, 0.0
    %119 = vadd.xlane.f32.xlu0 %v118
    %v120 = vpop.xlane.xlu0 %119
    %v121 = vsel %vm98, %v117, 0.0
    %122 = vadd.xlane.f32.xlu0 %v121
    %v123 = vpop.xlane.xlu0 %122
    %v124 = vmul.f32 %v120, %v111
    %v125 = vmul.f32 %v123, %v111
    %v126 = vadd.f32 %v124, 1e-05
    %v127 = vadd.f32 %v125, 1e-05
    %v128 = vrsqrt.pop %v126
    %v129 = vmul.f32 %v128, %v126
    %v130 = vmul.f32 %v129, %v128
    %v131 = vmul.f32 0.5, %v130
    %v132 = vsub.f32 1.5, %v131
    %v133 = vmul.f32 %v128, %v132
    %vm134 = vweird.f32 %v126
    %vm135 = vweird.f32 %v128
    %vm136 = vmor %vm134, %vm135
    %v137 = vsel %vm136, %v128, %v133
    %v138 = vrsqrt.pop %v127
    %v139 = vmul.f32 %v138, %v127
    %v140 = vmul.f32 %v139, %v138
    %v141 = vmul.f32 0.5, %v140
    %v142 = vsub.f32 1.5, %v141
    %v143 = vmul.f32 %v138, %v142
    %vm144 = vweird.f32 %v127
    %vm145 = vweird.f32 %v138
    %vm146 = vmor %vm144, %vm145
    %v147 = vsel %vm146, %v138, %v143
    %v148 = vmul.f32 %v114, %v137
    %v149 = vmul.f32 %v115, %v147
    %v150 = vperm.slane %v92, 0
    %v151 = vmul.f32 %v148, %v150
    %v152 = vmul.f32 %v149, %v150
    %v153 = vperm.slane %v93, 0
    %v154 = vadd.f32 %v151, %v153
    %v155 = vadd.f32 %v152, %v153
    %v156 = vperm.slane %v85, 0
    %v158 = vsel %vm98, %v154, 0
    %v161 = vsel %vm98, %v155, 0
    %163 = vmatpush.msra.mxu0 0.0
    %164 = vmatpush.msra.mxu0 0.0
    %165 = vmatpush.msra.mxu0 0.0
    %166 = vmatpush.msra.mxu0 0.0
    %167 = vmatpush.msra.mxu0 0.0
    %168 = vmatpush.msra.mxu0 0.0
    %169 = vmatpush.msra.mxu0 0.0
    %170 = vmatpush.msra.mxu0 0.0
    %171 = vmatpush.msra.mxu0 0.0
    %172 = vmatpush.msra.mxu0 0.0
    %173 = vmatpush.msra.mxu0 0.0
    %174 = vmatpush.msra.mxu0 0.0
    %175 = vmatpush.msra.mxu0 %v76
    %176 = vmatpush.msra.mxu0 %v75
    %177 = vmatpush.msra.mxu0 %v74
    %178 = vmatpush.msra.mxu0 %v73
    %179 = vmatmul.f32.gmra.mxu0 %v158
    %v180 = vpop.f32.mrf.mxu0
    %v181 = vadd.f32 %v156, %v180
    %182 = vmatmul.f32.gmra.mxu0 %v161
    %v183 = vpop.f32.mrf.mxu0
    %v184 = vadd.f32 %v156, %v183
    %185 = vdwg.mxu0
    %188 = vrot.lane.b32.xlu0 %v181, 120
    %v189 = vpop.permute.xlu0 %188
    %190 = vrot.lane.b32.xlu0 %v184, 120
    %v191 = vpop.permute.xlu0 %190
    %192 = vrot.lane.b32.xlu0 %v181, 112
    %v193 = vpop.permute.xlu0 %192
    %194 = vrot.lane.b32.xlu0 %v184, 112
    %v195 = vpop.permute.xlu0 %194
    %196 = vrot.lane.b32.xlu0 %v181, 104
    %v197 = vpop.permute.xlu0 %196
    %198 = vrot.lane.b32.xlu0 %v184, 104
    %v199 = vpop.permute.xlu0 %198
    %200 = vrot.lane.b32.xlu0 %v181, 96
    %v201 = vpop.permute.xlu0 %200
    %vm202 = vcmask 64512
    %v203 = vsel %vm202, %v181, 0
    %v205 = vsel %vm202, %v201, 0
    %207 = vmatpush.xpose.msra.mxu0 0.0
    %208 = vmatpush.xpose.msra.mxu0 0.0
    %209 = vmatpush.xpose.msra.mxu0 0.0
    %210 = vmatpush.xpose.msra.mxu0 0.0
    %211 = vmatpush.xpose.msra.mxu0 0.0
    %212 = vmatpush.xpose.msra.mxu0 0.0
    %213 = vmatpush.xpose.msra.mxu0 0.0
    %214 = vmatpush.xpose.msra.mxu0 0.0
    %215 = vmatpush.xpose.msra.mxu0 0.0
    %216 = vmatpush.xpose.msra.mxu0 0.0
    %217 = vmatpush.xpose.msra.mxu0 0.0
    %218 = vmatpush.xpose.msra.mxu0 0.0
    %219 = vmatpush.xpose.msra.mxu0 0.0
    %220 = vmatpush.xpose.msra.mxu0 0.0
    %221 = vmatpush.xpose.msra.mxu0 0.0
    %222 = vmatpush.xpose.msra.mxu0 %v205
    %223 = vmatmul.f32.gmra.mxu0 %v203
    %v224 = vpop.f32.mrf.mxu0
    %v225 = vadd.f32 %v72, %v224
    %226 = vdwg.mxu0
    %227 = vrot.lane.b32.xlu0 %v184, 96
    %v228 = vpop.permute.xlu0 %227
    %v229 = vsel %vm202, %v184, 0
    %v231 = vsel %vm202, %v228, 0
    %233 = vmatpush.xpose.msra.mxu0 0.0
    %234 = vmatpush.xpose.msra.mxu0 0.0
    %235 = vmatpush.xpose.msra.mxu0 0.0
    %236 = vmatpush.xpose.msra.mxu0 0.0
    %237 = vmatpush.xpose.msra.mxu0 0.0
    %238 = vmatpush.xpose.msra.mxu0 0.0
    %239 = vmatpush.xpose.msra.mxu0 0.0
    %240 = vmatpush.xpose.msra.mxu0 0.0
    %241 = vmatpush.xpose.msra.mxu0 0.0
    %242 = vmatpush.xpose.msra.mxu0 0.0
    %243 = vmatpush.xpose.msra.mxu0 0.0
    %244 = vmatpush.xpose.msra.mxu0 0.0
    %245 = vmatpush.xpose.msra.mxu0 0.0
    %246 = vmatpush.xpose.msra.mxu0 0.0
    %247 = vmatpush.xpose.msra.mxu0 0.0
    %248 = vmatpush.xpose.msra.mxu0 %v231
    %249 = vmatmul.f32.gmra.mxu0 %v229
    %v250 = vpop.f32.mrf.mxu0
    %v251 = vadd.f32 %v72, %v250
    %252 = vdwg.mxu0
    %253 = vrot.lane.b32.xlu0 %v189, 96
    %v254 = vpop.permute.xlu0 %253
    %v255 = vsel %vm202, %v189, 0
    %v257 = vsel %vm202, %v254, 0
    %259 = vmatpush.xpose.msra.mxu0 0.0
    %260 = vmatpush.xpose.msra.mxu0 0.0
    %261 = vmatpush.xpose.msra.mxu0 0.0
    %262 = vmatpush.xpose.msra.mxu0 0.0
    %263 = vmatpush.xpose.msra.mxu0 0.0
    %264 = vmatpush.xpose.msra.mxu0 0.0
    %265 = vmatpush.xpose.msra.mxu0 0.0
    %266 = vmatpush.xpose.msra.mxu0 0.0
    %267 = vmatpush.xpose.msra.mxu0 0.0
    %268 = vmatpush.xpose.msra.mxu0 0.0
    %269 = vmatpush.xpose.msra.mxu0 0.0
    %270 = vmatpush.xpose.msra.mxu0 0.0
    %271 = vmatpush.xpose.msra.mxu0 0.0
    %272 = vmatpush.xpose.msra.mxu0 0.0
    %273 = vmatpush.xpose.msra.mxu0 0.0
    %274 = vmatpush.xpose.msra.mxu0 %v257
    %275 = vmatmul.f32.gmra.mxu0 %v255
    %v276 = vpop.f32.mrf.mxu0
    %v277 = vadd.f32 %v72, %v276
    %278 = vdwg.mxu0
    %279 = vrot.lane.b32.xlu0 %v191, 96
    %v280 = vpop.permute.xlu0 %279
    %v281 = vsel %vm202, %v191, 0
    %v283 = vsel %vm202, %v280, 0
    %285 = vmatpush.xpose.msra.mxu0 0.0
    %286 = vmatpush.xpose.msra.mxu0 0.0
    %287 = vmatpush.xpose.msra.mxu0 0.0
    %288 = vmatpush.xpose.msra.mxu0 0.0
    %289 = vmatpush.xpose.msra.mxu0 0.0
    %290 = vmatpush.xpose.msra.mxu0 0.0
    %291 = vmatpush.xpose.msra.mxu0 0.0
    %292 = vmatpush.xpose.msra.mxu0 0.0
    %293 = vmatpush.xpose.msra.mxu0 0.0
    %294 = vmatpush.xpose.msra.mxu0 0.0
    %295 = vmatpush.xpose.msra.mxu0 0.0
    %296 = vmatpush.xpose.msra.mxu0 0.0
    %297 = vmatpush.xpose.msra.mxu0 0.0
    %298 = vmatpush.xpose.msra.mxu0 0.0
    %299 = vmatpush.xpose.msra.mxu0 0.0
    %300 = vmatpush.xpose.msra.mxu0 %v283
    %301 = vmatmul.f32.gmra.mxu0 %v281
    %v302 = vpop.f32.mrf.mxu0
    %v303 = vadd.f32 %v72, %v302
    %304 = vdwg.mxu0
    %305 = vrot.lane.b32.xlu0 %v193, 96
    %v306 = vpop.permute.xlu0 %305
    %v307 = vsel %vm202, %v193, 0
    %v309 = vsel %vm202, %v306, 0
    %311 = vmatpush.xpose.msra.mxu0 0.0
    %312 = vmatpush.xpose.msra.mxu0 0.0
    %313 = vmatpush.xpose.msra.mxu0 0.0
    %314 = vmatpush.xpose.msra.mxu0 0.0
    %315 = vmatpush.xpose.msra.mxu0 0.0
    %316 = vmatpush.xpose.msra.mxu0 0.0
    %317 = vmatpush.xpose.msra.mxu0 0.0
    %318 = vmatpush.xpose.msra.mxu0 0.0
    %319 = vmatpush.xpose.msra.mxu0 0.0
    %320 = vmatpush.xpose.msra.mxu0 0.0
    %321 = vmatpush.xpose.msra.mxu0 0.0
    %322 = vmatpush.xpose.msra.mxu0 0.0
    %323 = vmatpush.xpose.msra.mxu0 0.0
    %324 = vmatpush.xpose.msra.mxu0 0.0
    %325 = vmatpush.xpose.msra.mxu0 0.0
    %326 = vmatpush.xpose.msra.mxu0 %v309
    %327 = vmatmul.f32.gmra.mxu0 %v307
    %v328 = vpop.f32.mrf.mxu0
    %v329 = vadd.f32 %v72, %v328
    %330 = vdwg.mxu0
    %331 = vrot.lane.b32.xlu0 %v195, 96
    %v332 = vpop.permute.xlu0 %331
    %v333 = vsel %vm202, %v195, 0
    %v335 = vsel %vm202, %v332, 0
    %337 = vmatpush.xpose.msra.mxu0 0.0
    %338 = vmatpush.xpose.msra.mxu0 0.0
    %339 = vmatpush.xpose.msra.mxu0 0.0
    %340 = vmatpush.xpose.msra.mxu0 0.0
    %341 = vmatpush.xpose.msra.mxu0 0.0
    %342 = vmatpush.xpose.msra.mxu0 0.0
    %343 = vmatpush.xpose.msra.mxu0 0.0
    %344 = vmatpush.xpose.msra.mxu0 0.0
    %345 = vmatpush.xpose.msra.mxu0 0.0
    %346 = vmatpush.xpose.msra.mxu0 0.0
    %347 = vmatpush.xpose.msra.mxu0 0.0
    %348 = vmatpush.xpose.msra.mxu0 0.0
    %349 = vmatpush.xpose.msra.mxu0 0.0
    %350 = vmatpush.xpose.msra.mxu0 0.0
    %351 = vmatpush.xpose.msra.mxu0 0.0
    %352 = vmatpush.xpose.msra.mxu0 %v335
    %353 = vmatmul.f32.gmra.mxu0 %v333
    %v354 = vpop.f32.mrf.mxu0
    %v355 = vadd.f32 %v72, %v354
    %356 = vdwg.mxu0
    %357 = vrot.lane.b32.xlu0 %v197, 96
    %v358 = vpop.permute.xlu0 %357
    %v359 = vsel %vm202, %v197, 0
    %v361 = vsel %vm202, %v358, 0
    %363 = vmatpush.xpose.msra.mxu0 0.0
    %364 = vmatpush.xpose.msra.mxu0 0.0
    %365 = vmatpush.xpose.msra.mxu0 0.0
    %366 = vmatpush.xpose.msra.mxu0 0.0
    %367 = vmatpush.xpose.msra.mxu0 0.0
    %368 = vmatpush.xpose.msra.mxu0 0.0
    %369 = vmatpush.xpose.msra.mxu0 0.0
    %370 = vmatpush.xpose.msra.mxu0 0.0
    %371 = vmatpush.xpose.msra.mxu0 0.0
    %372 = vmatpush.xpose.msra.mxu0 0.0
    %373 = vmatpush.xpose.msra.mxu0 0.0
    %374 = vmatpush.xpose.msra.mxu0 0.0
    %375 = vmatpush.xpose.msra.mxu0 0.0
    %376 = vmatpush.xpose.msra.mxu0 0.0
    %377 = vmatpush.xpose.msra.mxu0 0.0
    %378 = vmatpush.xpose.msra.mxu0 %v361
    %379 = vmatmul.f32.gmra.mxu0 %v359
    %v380 = vpop.f32.mrf.mxu0
    %v381 = vadd.f32 %v72, %v380
    %382 = vdwg.mxu0
    %383 = vrot.lane.b32.xlu0 %v199, 96
    %v384 = vpop.permute.xlu0 %383
    %v385 = vsel %vm202, %v199, 0
    %v387 = vsel %vm202, %v384, 0
    %389 = vmatpush.xpose.msra.mxu0 0.0
    %390 = vmatpush.xpose.msra.mxu0 0.0
    %391 = vmatpush.xpose.msra.mxu0 0.0
    %392 = vmatpush.xpose.msra.mxu0 0.0
    %393 = vmatpush.xpose.msra.mxu0 0.0
    %394 = vmatpush.xpose.msra.mxu0 0.0
    %395 = vmatpush.xpose.msra.mxu0 0.0
    %396 = vmatpush.xpose.msra.mxu0 0.0
    %397 = vmatpush.xpose.msra.mxu0 0.0
    %398 = vmatpush.xpose.msra.mxu0 0.0
    %399 = vmatpush.xpose.msra.mxu0 0.0
    %400 = vmatpush.xpose.msra.mxu0 0.0
    %401 = vmatpush.xpose.msra.mxu0 0.0
    %402 = vmatpush.xpose.msra.mxu0 0.0
    %403 = vmatpush.xpose.msra.mxu0 0.0
    %404 = vmatpush.xpose.msra.mxu0 %v387
    %405 = vmatmul.f32.gmra.mxu0 %v385
    %v406 = vpop.f32.mrf.mxu0
    %v407 = vadd.f32 %v72, %v406
    %408 = vdwg.mxu0
    %v409 = vsel %vm202, %v225, -inf
    %410 = vmax.xlane.f32.xlu0 %v409
    %v411 = vpop.xlane.xlu0 %410
    %v412 = vsel %vm202, %v251, -inf
    %413 = vmax.xlane.f32.xlu0 %v412
    %v414 = vpop.xlane.xlu0 %413
    %v415 = vsel %vm202, %v277, -inf
    %416 = vmax.xlane.f32.xlu0 %v415
    %v417 = vpop.xlane.xlu0 %416
    %v418 = vsel %vm202, %v303, -inf
    %419 = vmax.xlane.f32.xlu0 %v418
    %v420 = vpop.xlane.xlu0 %419
    %v421 = vsel %vm202, %v329, -inf
    %422 = vmax.xlane.f32.xlu0 %v421
    %v423 = vpop.xlane.xlu0 %422
    %v424 = vsel %vm202, %v355, -inf
    %425 = vmax.xlane.f32.xlu0 %v424
    %v426 = vpop.xlane.xlu0 %425
    %v427 = vsel %vm202, %v381, -inf
    %428 = vmax.xlane.f32.xlu0 %v427
    %v429 = vpop.xlane.xlu0 %428
    %v430 = vsel %vm202, %v407, -inf
    %431 = vmax.xlane.f32.xlu0 %v430
    %v432 = vpop.xlane.xlu0 %431
    %v433 = vsub.f32 %v225, %v411
    %v434 = vsub.f32 %v251, %v414
    %v435 = vsub.f32 %v277, %v417
    %v436 = vsub.f32 %v303, %v420
    %v437 = vsub.f32 %v329, %v423
    %v438 = vsub.f32 %v355, %v426
    %v439 = vsub.f32 %v381, %v429
    %v440 = vsub.f32 %v407, %v432
    %v441 = vmul.f32 %v433, 1.442695
    %v442 = vpow.pop %v441
    %v443 = vmul.f32 %v434, 1.442695
    %v444 = vpow.pop %v443
    %v445 = vmul.f32 %v435, 1.442695
    %v446 = vpow.pop %v445
    %v447 = vmul.f32 %v436, 1.442695
    %v448 = vpow.pop %v447
    %v449 = vmul.f32 %v437, 1.442695
    %v450 = vpow.pop %v449
    %v451 = vmul.f32 %v438, 1.442695
    %v452 = vpow.pop %v451
    %v453 = vmul.f32 %v439, 1.442695
    %v454 = vpow.pop %v453
    %v455 = vmul.f32 %v440, 1.442695
    %v456 = vpow.pop %v455
    %v457 = vsel %vm202, %v442, 0.0
    %458 = vadd.xlane.f32.xlu0 %v457
    %v459 = vpop.xlane.xlu0 %458
    %v460 = vsel %vm202, %v444, 0.0
    %461 = vadd.xlane.f32.xlu0 %v460
    %v462 = vpop.xlane.xlu0 %461
    %v463 = vsel %vm202, %v446, 0.0
    %464 = vadd.xlane.f32.xlu0 %v463
    %v465 = vpop.xlane.xlu0 %464
    %v466 = vsel %vm202, %v448, 0.0
    %467 = vadd.xlane.f32.xlu0 %v466
    %v468 = vpop.xlane.xlu0 %467
    %v469 = vsel %vm202, %v450, 0.0
    %470 = vadd.xlane.f32.xlu0 %v469
    %v471 = vpop.xlane.xlu0 %470
    %v472 = vsel %vm202, %v452, 0.0
    %473 = vadd.xlane.f32.xlu0 %v472
    %v474 = vpop.xlane.xlu0 %473
    %v475 = vsel %vm202, %v454, 0.0
    %476 = vadd.xlane.f32.xlu0 %v475
    %v477 = vpop.xlane.xlu0 %476
    %v478 = vsel %vm202, %v456, 0.0
    %479 = vadd.xlane.f32.xlu0 %v478
    %v480 = vpop.xlane.xlu0 %479
    %v481 = vrcp.pop %v459
    %v482 = vrcp.pop %v462
    %v483 = vrcp.pop %v465
    %v484 = vrcp.pop %v468
    %v485 = vrcp.pop %v471
    %v486 = vrcp.pop %v474
    %v487 = vrcp.pop %v477
    %v488 = vrcp.pop %v480
    %v489 = vmul.f32 %v442, %v481
    %v490 = vmul.f32 %v444, %v482
    %v491 = vmul.f32 %v446, %v483
    %v492 = vmul.f32 %v448, %v484
    %v493 = vmul.f32 %v450, %v485
    %v494 = vmul.f32 %v452, %v486
    %v495 = vmul.f32 %v454, %v487
    %v496 = vmul.f32 %v456, %v488
    %497 = vrot.lane.b32.xlu0 %v181, 64
    %v498 = vpop.permute.xlu0 %497
    %v501 = vsel %vm202, %v489, 0
    %503 = vmatpush.msra.mxu0 0.0
    %504 = vmatpush.msra.mxu0 0.0
    %505 = vmatpush.msra.mxu0 0.0
    %506 = vmatpush.msra.mxu0 0.0
    %507 = vmatpush.msra.mxu0 0.0
    %508 = vmatpush.msra.mxu0 0.0
    %509 = vmatpush.msra.mxu0 0.0
    %510 = vmatpush.msra.mxu0 0.0
    %511 = vmatpush.msra.mxu0 0.0
    %512 = vmatpush.msra.mxu0 0.0
    %513 = vmatpush.msra.mxu0 0.0
    %514 = vmatpush.msra.mxu0 0.0
    %515 = vmatpush.msra.mxu0 0.0
    %516 = vmatpush.msra.mxu0 0.0
    %517 = vmatpush.msra.mxu0 0.0
    %518 = vmatpush.msra.mxu0 %v498
    %519 = vmatmul.f32.gmra.mxu0 %v501
    %v520 = vpop.f32.mrf.mxu0
    %v521 = vadd.f32 0.0, %v520
    %522 = vdwg.mxu0
    %523 = vrot.lane.b32.xlu0 %v184, 64
    %v524 = vpop.permute.xlu0 %523
    %v527 = vsel %vm202, %v490, 0
    %529 = vmatpush.msra.mxu0 0.0
    %530 = vmatpush.msra.mxu0 0.0
    %531 = vmatpush.msra.mxu0 0.0
    %532 = vmatpush.msra.mxu0 0.0
    %533 = vmatpush.msra.mxu0 0.0
    %534 = vmatpush.msra.mxu0 0.0
    %535 = vmatpush.msra.mxu0 0.0
    %536 = vmatpush.msra.mxu0 0.0
    %537 = vmatpush.msra.mxu0 0.0
    %538 = vmatpush.msra.mxu0 0.0
    %539 = vmatpush.msra.mxu0 0.0
    %540 = vmatpush.msra.mxu0 0.0
    %541 = vmatpush.msra.mxu0 0.0
    %542 = vmatpush.msra.mxu0 0.0
    %543 = vmatpush.msra.mxu0 0.0
    %544 = vmatpush.msra.mxu0 %v524
    %545 = vmatmul.f32.gmra.mxu0 %v527
    %v546 = vpop.f32.mrf.mxu0
    %v547 = vadd.f32 0.0, %v546
    %548 = vdwg.mxu0
    %549 = vrot.lane.b32.xlu0 %v189, 64
    %v550 = vpop.permute.xlu0 %549
    %v553 = vsel %vm202, %v491, 0
    %555 = vmatpush.msra.mxu0 0.0
    %556 = vmatpush.msra.mxu0 0.0
    %557 = vmatpush.msra.mxu0 0.0
    %558 = vmatpush.msra.mxu0 0.0
    %559 = vmatpush.msra.mxu0 0.0
    %560 = vmatpush.msra.mxu0 0.0
    %561 = vmatpush.msra.mxu0 0.0
    %562 = vmatpush.msra.mxu0 0.0
    %563 = vmatpush.msra.mxu0 0.0
    %564 = vmatpush.msra.mxu0 0.0
    %565 = vmatpush.msra.mxu0 0.0
    %566 = vmatpush.msra.mxu0 0.0
    %567 = vmatpush.msra.mxu0 0.0
    %568 = vmatpush.msra.mxu0 0.0
    %569 = vmatpush.msra.mxu0 0.0
    %570 = vmatpush.msra.mxu0 %v550
    %571 = vmatmul.f32.gmra.mxu0 %v553
    %v572 = vpop.f32.mrf.mxu0
    %v573 = vadd.f32 0.0, %v572
    %574 = vdwg.mxu0
    %575 = vrot.lane.b32.xlu0 %v191, 64
    %v576 = vpop.permute.xlu0 %575
    %v579 = vsel %vm202, %v492, 0
    %581 = vmatpush.msra.mxu0 0.0
    %582 = vmatpush.msra.mxu0 0.0
    %583 = vmatpush.msra.mxu0 0.0
    %584 = vmatpush.msra.mxu0 0.0
    %585 = vmatpush.msra.mxu0 0.0
    %586 = vmatpush.msra.mxu0 0.0
    %587 = vmatpush.msra.mxu0 0.0
    %588 = vmatpush.msra.mxu0 0.0
    %589 = vmatpush.msra.mxu0 0.0
    %590 = vmatpush.msra.mxu0 0.0
    %591 = vmatpush.msra.mxu0 0.0
    %592 = vmatpush.msra.mxu0 0.0
    %593 = vmatpush.msra.mxu0 0.0
    %594 = vmatpush.msra.mxu0 0.0
    %595 = vmatpush.msra.mxu0 0.0
    %596 = vmatpush.msra.mxu0 %v576
    %597 = vmatmul.f32.gmra.mxu0 %v579
    %v598 = vpop.f32.mrf.mxu0
    %v599 = vadd.f32 0.0, %v598
    %600 = vdwg.mxu0
    %601 = vrot.lane.b32.xlu0 %v193, 64
    %v602 = vpop.permute.xlu0 %601
    %v605 = vsel %vm202, %v493, 0
    %607 = vmatpush.msra.mxu0 0.0
    %608 = vmatpush.msra.mxu0 0.0
    %609 = vmatpush.msra.mxu0 0.0
    %610 = vmatpush.msra.mxu0 0.0
    %611 = vmatpush.msra.mxu0 0.0
    %612 = vmatpush.msra.mxu0 0.0
    %613 = vmatpush.msra.mxu0 0.0
    %614 = vmatpush.msra.mxu0 0.0
    %615 = vmatpush.msra.mxu0 0.0
    %616 = vmatpush.msra.mxu0 0.0
    %617 = vmatpush.msra.mxu0 0.0
    %618 = vmatpush.msra.mxu0 0.0
    %619 = vmatpush.msra.mxu0 0.0
    %620 = vmatpush.msra.mxu0 0.0
    %621 = vmatpush.msra.mxu0 0.0
    %622 = vmatpush.msra.mxu0 %v602
    %623 = vmatmul.f32.gmra.mxu0 %v605
    %v624 = vpop.f32.mrf.mxu0
    %v625 = vadd.f32 0.0, %v624
    %626 = vdwg.mxu0
    %627 = vrot.lane.b32.xlu0 %v195, 64
    %v628 = vpop.permute.xlu0 %627
    %v631 = vsel %vm202, %v494, 0
    %633 = vmatpush.msra.mxu0 0.0
    %634 = vmatpush.msra.mxu0 0.0
    %635 = vmatpush.msra.mxu0 0.0
    %636 = vmatpush.msra.mxu0 0.0
    %637 = vmatpush.msra.mxu0 0.0
    %638 = vmatpush.msra.mxu0 0.0
    %639 = vmatpush.msra.mxu0 0.0
    %640 = vmatpush.msra.mxu0 0.0
    %641 = vmatpush.msra.mxu0 0.0
    %642 = vmatpush.msra.mxu0 0.0
    %643 = vmatpush.msra.mxu0 0.0
    %644 = vmatpush.msra.mxu0 0.0
    %645 = vmatpush.msra.mxu0 0.0
    %646 = vmatpush.msra.mxu0 0.0
    %647 = vmatpush.msra.mxu0 0.0
    %648 = vmatpush.msra.mxu0 %v628
    %649 = vmatmul.f32.gmra.mxu0 %v631
    %v650 = vpop.f32.mrf.mxu0
    %v651 = vadd.f32 0.0, %v650
    %652 = vdwg.mxu0
    %653 = vrot.lane.b32.xlu0 %v197, 64
    %v654 = vpop.permute.xlu0 %653
    %v657 = vsel %vm202, %v495, 0
    %659 = vmatpush.msra.mxu0 0.0
    %660 = vmatpush.msra.mxu0 0.0
    %661 = vmatpush.msra.mxu0 0.0
    %662 = vmatpush.msra.mxu0 0.0
    %663 = vmatpush.msra.mxu0 0.0
    %664 = vmatpush.msra.mxu0 0.0
    %665 = vmatpush.msra.mxu0 0.0
    %666 = vmatpush.msra.mxu0 0.0
    %667 = vmatpush.msra.mxu0 0.0
    %668 = vmatpush.msra.mxu0 0.0
    %669 = vmatpush.msra.mxu0 0.0
    %670 = vmatpush.msra.mxu0 0.0
    %671 = vmatpush.msra.mxu0 0.0
    %672 = vmatpush.msra.mxu0 0.0
    %673 = vmatpush.msra.mxu0 0.0
    %674 = vmatpush.msra.mxu0 %v654
    %675 = vmatmul.f32.gmra.mxu0 %v657
    %v676 = vpop.f32.mrf.mxu0
    %v677 = vadd.f32 0.0, %v676
    %678 = vdwg.mxu0
    %679 = vrot.lane.b32.xlu0 %v199, 64
    %v680 = vpop.permute.xlu0 %679
    %v683 = vsel %vm202, %v496, 0
    %685 = vmatpush.msra.mxu0 0.0
    %686 = vmatpush.msra.mxu0 0.0
    %687 = vmatpush.msra.mxu0 0.0
    %688 = vmatpush.msra.mxu0 0.0
    %689 = vmatpush.msra.mxu0 0.0
    %690 = vmatpush.msra.mxu0 0.0
    %691 = vmatpush.msra.mxu0 0.0
    %692 = vmatpush.msra.mxu0 0.0
    %693 = vmatpush.msra.mxu0 0.0
    %694 = vmatpush.msra.mxu0 0.0
    %695 = vmatpush.msra.mxu0 0.0
    %696 = vmatpush.msra.mxu0 0.0
    %697 = vmatpush.msra.mxu0 0.0
    %698 = vmatpush.msra.mxu0 0.0
    %699 = vmatpush.msra.mxu0 0.0
    %700 = vmatpush.msra.mxu0 %v680
    %701 = vmatmul.f32.gmra.mxu0 %v683
    %v702 = vpop.f32.mrf.mxu0
    %v703 = vadd.f32 0.0, %v702
    %704 = vdwg.mxu0
    %707 = vrot.lane.b32.xlu0 %v573, 8
    %v708 = vpop.permute.xlu0 %707
    %709 = vrot.lane.b32.xlu0 %v599, 8
    %v710 = vpop.permute.xlu0 %709
    %715 = vrot.lane.b32.xlu0 %v625, 16
    %v716 = vpop.permute.xlu0 %715
    %717 = vrot.lane.b32.xlu0 %v651, 16
    %v718 = vpop.permute.xlu0 %717
    %723 = vrot.lane.b32.xlu0 %v677, 24
    %v724 = vpop.permute.xlu0 %723
    %725 = vrot.lane.b32.xlu0 %v703, 24
    %v726 = vpop.permute.xlu0 %725
    %v729 = vsel %vm202, %v521, %v708
    %v730 = vsel %vm202, %v547, %v710
    %vm731 = vcmask 130048
    %v732 = vsel %vm731, %v729, %v716
    %v733 = vsel %vm731, %v730, %v718
    %vm734 = vcmask 195584
    %v735 = vsel %vm734, %v732, %v724
    %v736 = vsel %vm734, %v733, %v726
    %v737 = vperm.slane %v87, 0
    %742 = vrot.lane.b32.xlu0 %v73, 32
    %v743 = vpop.permute.xlu0 %742
    %744 = vrot.lane.b32.xlu0 %v74, 32
    %v745 = vpop.permute.xlu0 %744
    %746 = vrot.lane.b32.xlu0 %v75, 32
    %v747 = vpop.permute.xlu0 %746
    %748 = vrot.lane.b32.xlu0 %v76, 32
    %v749 = vpop.permute.xlu0 %748
    %v755 = vsel %vm98, %v735, 0
    %v758 = vsel %vm98, %v736, 0
    %760 = vmatpush.msra.mxu0 0.0
    %761 = vmatpush.msra.mxu0 0.0
    %762 = vmatpush.msra.mxu0 0.0
    %763 = vmatpush.msra.mxu0 0.0
    %764 = vmatpush.msra.mxu0 0.0
    %765 = vmatpush.msra.mxu0 0.0
    %766 = vmatpush.msra.mxu0 0.0
    %767 = vmatpush.msra.mxu0 0.0
    %768 = vmatpush.msra.mxu0 0.0
    %769 = vmatpush.msra.mxu0 0.0
    %770 = vmatpush.msra.mxu0 0.0
    %771 = vmatpush.msra.mxu0 0.0
    %772 = vmatpush.msra.mxu0 %v749
    %773 = vmatpush.msra.mxu0 %v747
    %774 = vmatpush.msra.mxu0 %v745
    %775 = vmatpush.msra.mxu0 %v743
    %776 = vmatmul.f32.gmra.mxu0 %v755
    %v777 = vpop.f32.mrf.mxu0
    %v778 = vadd.f32 %v737, %v777
    %779 = vmatmul.f32.gmra.mxu0 %v758
    %v780 = vpop.f32.mrf.mxu0
    %v781 = vadd.f32 %v737, %v780
    %782 = vdwg.mxu0
    %v783 = vadd.f32 %v68, %v778
    %v784 = vadd.f32 %v69, %v781
    %v785 = vsel %vm98, %v783, 0.0
    %786 = vadd.xlane.f32.xlu0 %v785
    %v787 = vpop.xlane.xlu0 %786
    %v788 = vsel %vm98, %v784, 0.0
    %789 = vadd.xlane.f32.xlu0 %v788
    %v790 = vpop.xlane.xlu0 %789
    %v791 = vmul.f32 %v787, %v111
    %v792 = vmul.f32 %v790, %v111
    %v793 = vsub.f32 %v783, %v791
    %v794 = vsub.f32 %v784, %v792
    %v795 = vmul.f32 %v793, %v793
    %v796 = vmul.f32 %v794, %v794
    %v797 = vsel %vm98, %v795, 0.0
    %798 = vadd.xlane.f32.xlu0 %v797
    %v799 = vpop.xlane.xlu0 %798
    %v800 = vsel %vm98, %v796, 0.0
    %801 = vadd.xlane.f32.xlu0 %v800
    %v802 = vpop.xlane.xlu0 %801
    %v803 = vmul.f32 %v799, %v111
    %v804 = vmul.f32 %v802, %v111
    %v805 = vadd.f32 %v803, 1e-05
    %v806 = vadd.f32 %v804, 1e-05
    %v807 = vrsqrt.pop %v805
    %v808 = vmul.f32 %v807, %v805
    %v809 = vmul.f32 %v808, %v807
    %v810 = vmul.f32 0.5, %v809
    %v811 = vsub.f32 1.5, %v810
    %v812 = vmul.f32 %v807, %v811
    %vm813 = vweird.f32 %v805
    %vm814 = vweird.f32 %v807
    %vm815 = vmor %vm813, %vm814
    %v816 = vsel %vm815, %v807, %v812
    %v817 = vrsqrt.pop %v806
    %v818 = vmul.f32 %v817, %v806
    %v819 = vmul.f32 %v818, %v817
    %v820 = vmul.f32 0.5, %v819
    %v821 = vsub.f32 1.5, %v820
    %v822 = vmul.f32 %v817, %v821
    %vm823 = vweird.f32 %v806
    %vm824 = vweird.f32 %v817
    %vm825 = vmor %vm823, %vm824
    %v826 = vsel %vm825, %v817, %v822
    %v827 = vmul.f32 %v793, %v816
    %v828 = vmul.f32 %v794, %v826
    %v829 = vperm.slane %v94, 0
    %v830 = vmul.f32 %v827, %v829
    %v831 = vmul.f32 %v828, %v829
    %v832 = vperm.slane %v95, 0
    %v833 = vadd.f32 %v830, %v832
    %v834 = vadd.f32 %v831, %v832
    %v835 = vperm.slane %v86, 0
    %v837 = vsel %vm98, %v70, 0
    %v840 = vsel %vm98, %v71, 0
    %842 = vmatpush.msra.mxu0 0.0
    %843 = vmatpush.msra.mxu0 0.0
    %844 = vmatpush.msra.mxu0 0.0
    %845 = vmatpush.msra.mxu0 0.0
    %846 = vmatpush.msra.mxu0 0.0
    %847 = vmatpush.msra.mxu0 0.0
    %848 = vmatpush.msra.mxu0 0.0
    %849 = vmatpush.msra.mxu0 0.0
    %850 = vmatpush.msra.mxu0 0.0
    %851 = vmatpush.msra.mxu0 0.0
    %852 = vmatpush.msra.mxu0 0.0
    %853 = vmatpush.msra.mxu0 0.0
    %854 = vmatpush.msra.mxu0 %v80
    %855 = vmatpush.msra.mxu0 %v79
    %856 = vmatpush.msra.mxu0 %v78
    %857 = vmatpush.msra.mxu0 %v77
    %858 = vmatmul.f32.gmra.mxu0 %v837
    %v859 = vpop.f32.mrf.mxu0
    %v860 = vadd.f32 %v835, %v859
    %861 = vmatmul.f32.gmra.mxu0 %v840
    %v862 = vpop.f32.mrf.mxu0
    %v863 = vadd.f32 %v835, %v862
    %864 = vdwg.mxu0
    %v865 = vperm.slane %v88, 0
    %870 = vrot.lane.b32.xlu0 %v77, 64
    %v871 = vpop.permute.xlu0 %870
    %872 = vrot.lane.b32.xlu0 %v78, 64
    %v873 = vpop.permute.xlu0 %872
    %874 = vrot.lane.b32.xlu0 %v79, 64
    %v875 = vpop.permute.xlu0 %874
    %876 = vrot.lane.b32.xlu0 %v80, 64
    %v877 = vpop.permute.xlu0 %876
    %v883 = vsel %vm98, %v833, 0
    %v886 = vsel %vm98, %v834, 0
    %888 = vmatpush.msra.mxu0 0.0
    %889 = vmatpush.msra.mxu0 0.0
    %890 = vmatpush.msra.mxu0 0.0
    %891 = vmatpush.msra.mxu0 0.0
    %892 = vmatpush.msra.mxu0 0.0
    %893 = vmatpush.msra.mxu0 0.0
    %894 = vmatpush.msra.mxu0 0.0
    %895 = vmatpush.msra.mxu0 0.0
    %896 = vmatpush.msra.mxu0 0.0
    %897 = vmatpush.msra.mxu0 0.0
    %898 = vmatpush.msra.mxu0 0.0
    %899 = vmatpush.msra.mxu0 0.0
    %900 = vmatpush.msra.mxu0 %v877
    %901 = vmatpush.msra.mxu0 %v875
    %902 = vmatpush.msra.mxu0 %v873
    %903 = vmatpush.msra.mxu0 %v871
    %904 = vmatmul.f32.gmra.mxu0 %v883
    %v905 = vpop.f32.mrf.mxu0
    %v906 = vadd.f32 %v865, %v905
    %907 = vmatmul.f32.gmra.mxu0 %v886
    %v908 = vpop.f32.mrf.mxu0
    %v909 = vadd.f32 %v865, %v908
    %910 = vdwg.mxu0
    %913 = vrot.lane.b32.xlu0 %v860, 120
    %v914 = vpop.permute.xlu0 %913
    %915 = vrot.lane.b32.xlu0 %v863, 120
    %v916 = vpop.permute.xlu0 %915
    %917 = vrot.lane.b32.xlu0 %v860, 112
    %v918 = vpop.permute.xlu0 %917
    %919 = vrot.lane.b32.xlu0 %v863, 112
    %v920 = vpop.permute.xlu0 %919
    %921 = vrot.lane.b32.xlu0 %v860, 104
    %v922 = vpop.permute.xlu0 %921
    %923 = vrot.lane.b32.xlu0 %v863, 104
    %v924 = vpop.permute.xlu0 %923
    %927 = vrot.lane.b32.xlu0 %v906, 120
    %v928 = vpop.permute.xlu0 %927
    %929 = vrot.lane.b32.xlu0 %v909, 120
    %v930 = vpop.permute.xlu0 %929
    %933 = vrot.lane.b32.xlu0 %v906, 112
    %v934 = vpop.permute.xlu0 %933
    %935 = vrot.lane.b32.xlu0 %v909, 112
    %v936 = vpop.permute.xlu0 %935
    %939 = vrot.lane.b32.xlu0 %v906, 104
    %v940 = vpop.permute.xlu0 %939
    %941 = vrot.lane.b32.xlu0 %v909, 104
    %v942 = vpop.permute.xlu0 %941
    %945 = vrot.lane.b32.xlu0 %v860, 96
    %v946 = vpop.permute.xlu0 %945
    %v947 = vsel %vm202, %v860, 0
    %v949 = vsel %vm202, %v946, 0
    %951 = vmatpush.xpose.msra.mxu0 0.0
    %952 = vmatpush.xpose.msra.mxu0 0.0
    %953 = vmatpush.xpose.msra.mxu0 0.0
    %954 = vmatpush.xpose.msra.mxu0 0.0
    %955 = vmatpush.xpose.msra.mxu0 0.0
    %956 = vmatpush.xpose.msra.mxu0 0.0
    %957 = vmatpush.xpose.msra.mxu0 0.0
    %958 = vmatpush.xpose.msra.mxu0 0.0
    %959 = vmatpush.xpose.msra.mxu0 0.0
    %960 = vmatpush.xpose.msra.mxu0 0.0
    %961 = vmatpush.xpose.msra.mxu0 0.0
    %962 = vmatpush.xpose.msra.mxu0 0.0
    %963 = vmatpush.xpose.msra.mxu0 0.0
    %964 = vmatpush.xpose.msra.mxu0 0.0
    %965 = vmatpush.xpose.msra.mxu0 0.0
    %966 = vmatpush.xpose.msra.mxu0 %v949
    %967 = vmatmul.f32.gmra.mxu0 %v947
    %v968 = vpop.f32.mrf.mxu0
    %v969 = vadd.f32 0.0, %v968
    %970 = vdwg.mxu0
    %971 = vrot.lane.b32.xlu0 %v863, 96
    %v972 = vpop.permute.xlu0 %971
    %v973 = vsel %vm202, %v863, 0
    %v975 = vsel %vm202, %v972, 0
    %977 = vmatpush.xpose.msra.mxu0 0.0
    %978 = vmatpush.xpose.msra.mxu0 0.0
    %979 = vmatpush.xpose.msra.mxu0 0.0
    %980 = vmatpush.xpose.msra.mxu0 0.0
    %981 = vmatpush.xpose.msra.mxu0 0.0
    %982 = vmatpush.xpose.msra.mxu0 0.0
    %983 = vmatpush.xpose.msra.mxu0 0.0
    %984 = vmatpush.xpose.msra.mxu0 0.0
    %985 = vmatpush.xpose.msra.mxu0 0.0
    %986 = vmatpush.xpose.msra.mxu0 0.0
    %987 = vmatpush.xpose.msra.mxu0 0.0
    %988 = vmatpush.xpose.msra.mxu0 0.0
    %989 = vmatpush.xpose.msra.mxu0 0.0
    %990 = vmatpush.xpose.msra.mxu0 0.0
    %991 = vmatpush.xpose.msra.mxu0 0.0
    %992 = vmatpush.xpose.msra.mxu0 %v975
    %993 = vmatmul.f32.gmra.mxu0 %v973
    %v994 = vpop.f32.mrf.mxu0
    %v995 = vadd.f32 0.0, %v994
    %996 = vdwg.mxu0
    %997 = vrot.lane.b32.xlu0 %v914, 96
    %v998 = vpop.permute.xlu0 %997
    %v999 = vsel %vm202, %v914, 0
    %v1001 = vsel %vm202, %v998, 0
    %1003 = vmatpush.xpose.msra.mxu0 0.0
    %1004 = vmatpush.xpose.msra.mxu0 0.0
    %1005 = vmatpush.xpose.msra.mxu0 0.0
    %1006 = vmatpush.xpose.msra.mxu0 0.0
    %1007 = vmatpush.xpose.msra.mxu0 0.0
    %1008 = vmatpush.xpose.msra.mxu0 0.0
    %1009 = vmatpush.xpose.msra.mxu0 0.0
    %1010 = vmatpush.xpose.msra.mxu0 0.0
    %1011 = vmatpush.xpose.msra.mxu0 0.0
    %1012 = vmatpush.xpose.msra.mxu0 0.0
    %1013 = vmatpush.xpose.msra.mxu0 0.0
    %1014 = vmatpush.xpose.msra.mxu0 0.0
    %1015 = vmatpush.xpose.msra.mxu0 0.0
    %1016 = vmatpush.xpose.msra.mxu0 0.0
    %1017 = vmatpush.xpose.msra.mxu0 0.0
    %1018 = vmatpush.xpose.msra.mxu0 %v1001
    %1019 = vmatmul.f32.gmra.mxu0 %v999
    %v1020 = vpop.f32.mrf.mxu0
    %v1021 = vadd.f32 0.0, %v1020
    %1022 = vdwg.mxu0
    %1023 = vrot.lane.b32.xlu0 %v916, 96
    %v1024 = vpop.permute.xlu0 %1023
    %v1025 = vsel %vm202, %v916, 0
    %v1027 = vsel %vm202, %v1024, 0
    %1029 = vmatpush.xpose.msra.mxu0 0.0
    %1030 = vmatpush.xpose.msra.mxu0 0.0
    %1031 = vmatpush.xpose.msra.mxu0 0.0
    %1032 = vmatpush.xpose.msra.mxu0 0.0
    %1033 = vmatpush.xpose.msra.mxu0 0.0
    %1034 = vmatpush.xpose.msra.mxu0 0.0
    %1035 = vmatpush.xpose.msra.mxu0 0.0
    %1036 = vmatpush.xpose.msra.mxu0 0.0
    %1037 = vmatpush.xpose.msra.mxu0 0.0
    %1038 = vmatpush.xpose.msra.mxu0 0.0
    %1039 = vmatpush.xpose.msra.mxu0 0.0
    %1040 = vmatpush.xpose.msra.mxu0 0.0
    %1041 = vmatpush.xpose.msra.mxu0 0.0
    %1042 = vmatpush.xpose.msra.mxu0 0.0
    %1043 = vmatpush.xpose.msra.mxu0 0.0
    %1044 = vmatpush.xpose.msra.mxu0 %v1027
    %1045 = vmatmul.f32.gmra.mxu0 %v1025
    %v1046 = vpop.f32.mrf.mxu0
    %v1047 = vadd.f32 0.0, %v1046
    %1048 = vdwg.mxu0
    %1049 = vrot.lane.b32.xlu0 %v918, 96
    %v1050 = vpop.permute.xlu0 %1049
    %v1051 = vsel %vm202, %v918, 0
    %v1053 = vsel %vm202, %v1050, 0
    %1055 = vmatpush.xpose.msra.mxu0 0.0
    %1056 = vmatpush.xpose.msra.mxu0 0.0
    %1057 = vmatpush.xpose.msra.mxu0 0.0
    %1058 = vmatpush.xpose.msra.mxu0 0.0
    %1059 = vmatpush.xpose.msra.mxu0 0.0
    %1060 = vmatpush.xpose.msra.mxu0 0.0
    %1061 = vmatpush.xpose.msra.mxu0 0.0
    %1062 = vmatpush.xpose.msra.mxu0 0.0
    %1063 = vmatpush.xpose.msra.mxu0 0.0
    %1064 = vmatpush.xpose.msra.mxu0 0.0
    %1065 = vmatpush.xpose.msra.mxu0 0.0
    %1066 = vmatpush.xpose.msra.mxu0 0.0
    %1067 = vmatpush.xpose.msra.mxu0 0.0
    %1068 = vmatpush.xpose.msra.mxu0 0.0
    %1069 = vmatpush.xpose.msra.mxu0 0.0
    %1070 = vmatpush.xpose.msra.mxu0 %v1053
    %1071 = vmatmul.f32.gmra.mxu0 %v1051
    %v1072 = vpop.f32.mrf.mxu0
    %v1073 = vadd.f32 0.0, %v1072
    %1074 = vdwg.mxu0
    %1075 = vrot.lane.b32.xlu0 %v920, 96
    %v1076 = vpop.permute.xlu0 %1075
    %v1077 = vsel %vm202, %v920, 0
    %v1079 = vsel %vm202, %v1076, 0
    %1081 = vmatpush.xpose.msra.mxu0 0.0
    %1082 = vmatpush.xpose.msra.mxu0 0.0
    %1083 = vmatpush.xpose.msra.mxu0 0.0
    %1084 = vmatpush.xpose.msra.mxu0 0.0
    %1085 = vmatpush.xpose.msra.mxu0 0.0
    %1086 = vmatpush.xpose.msra.mxu0 0.0
    %1087 = vmatpush.xpose.msra.mxu0 0.0
    %1088 = vmatpush.xpose.msra.mxu0 0.0
    %1089 = vmatpush.xpose.msra.mxu0 0.0
    %1090 = vmatpush.xpose.msra.mxu0 0.0
    %1091 = vmatpush.xpose.msra.mxu0 0.0
    %1092 = vmatpush.xpose.msra.mxu0 0.0
    %1093 = vmatpush.xpose.msra.mxu0 0.0
    %1094 = vmatpush.xpose.msra.mxu0 0.0
    %1095 = vmatpush.xpose.msra.mxu0 0.0
    %1096 = vmatpush.xpose.msra.mxu0 %v1079
    %1097 = vmatmul.f32.gmra.mxu0 %v1077
    %v1098 = vpop.f32.mrf.mxu0
    %v1099 = vadd.f32 0.0, %v1098
    %1100 = vdwg.mxu0
    %1101 = vrot.lane.b32.xlu0 %v922, 96
    %v1102 = vpop.permute.xlu0 %1101
    %v1103 = vsel %vm202, %v922, 0
    %v1105 = vsel %vm202, %v1102, 0
    %1107 = vmatpush.xpose.msra.mxu0 0.0
    %1108 = vmatpush.xpose.msra.mxu0 0.0
    %1109 = vmatpush.xpose.msra.mxu0 0.0
    %1110 = vmatpush.xpose.msra.mxu0 0.0
    %1111 = vmatpush.xpose.msra.mxu0 0.0
    %1112 = vmatpush.xpose.msra.mxu0 0.0
    %1113 = vmatpush.xpose.msra.mxu0 0.0
    %1114 = vmatpush.xpose.msra.mxu0 0.0
    %1115 = vmatpush.xpose.msra.mxu0 0.0
    %1116 = vmatpush.xpose.msra.mxu0 0.0
    %1117 = vmatpush.xpose.msra.mxu0 0.0
    %1118 = vmatpush.xpose.msra.mxu0 0.0
    %1119 = vmatpush.xpose.msra.mxu0 0.0
    %1120 = vmatpush.xpose.msra.mxu0 0.0
    %1121 = vmatpush.xpose.msra.mxu0 0.0
    %1122 = vmatpush.xpose.msra.mxu0 %v1105
    %1123 = vmatmul.f32.gmra.mxu0 %v1103
    %v1124 = vpop.f32.mrf.mxu0
    %v1125 = vadd.f32 0.0, %v1124
    %1126 = vdwg.mxu0
    %1127 = vrot.lane.b32.xlu0 %v924, 96
    %v1128 = vpop.permute.xlu0 %1127
    %v1129 = vsel %vm202, %v924, 0
    %v1131 = vsel %vm202, %v1128, 0
    %1133 = vmatpush.xpose.msra.mxu0 0.0
    %1134 = vmatpush.xpose.msra.mxu0 0.0
    %1135 = vmatpush.xpose.msra.mxu0 0.0
    %1136 = vmatpush.xpose.msra.mxu0 0.0
    %1137 = vmatpush.xpose.msra.mxu0 0.0
    %1138 = vmatpush.xpose.msra.mxu0 0.0
    %1139 = vmatpush.xpose.msra.mxu0 0.0
    %1140 = vmatpush.xpose.msra.mxu0 0.0
    %1141 = vmatpush.xpose.msra.mxu0 0.0
    %1142 = vmatpush.xpose.msra.mxu0 0.0
    %1143 = vmatpush.xpose.msra.mxu0 0.0
    %1144 = vmatpush.xpose.msra.mxu0 0.0
    %1145 = vmatpush.xpose.msra.mxu0 0.0
    %1146 = vmatpush.xpose.msra.mxu0 0.0
    %1147 = vmatpush.xpose.msra.mxu0 0.0
    %1148 = vmatpush.xpose.msra.mxu0 %v1131
    %1149 = vmatmul.f32.gmra.mxu0 %v1129
    %v1150 = vpop.f32.mrf.mxu0
    %v1151 = vadd.f32 0.0, %v1150
    %1152 = vdwg.mxu0
    %v1153 = vsel %vm202, %v969, -inf
    %1154 = vmax.xlane.f32.xlu0 %v1153
    %v1155 = vpop.xlane.xlu0 %1154
    %v1156 = vsel %vm202, %v995, -inf
    %1157 = vmax.xlane.f32.xlu0 %v1156
    %v1158 = vpop.xlane.xlu0 %1157
    %v1159 = vsel %vm202, %v1021, -inf
    %1160 = vmax.xlane.f32.xlu0 %v1159
    %v1161 = vpop.xlane.xlu0 %1160
    %v1162 = vsel %vm202, %v1047, -inf
    %1163 = vmax.xlane.f32.xlu0 %v1162
    %v1164 = vpop.xlane.xlu0 %1163
    %v1165 = vsel %vm202, %v1073, -inf
    %1166 = vmax.xlane.f32.xlu0 %v1165
    %v1167 = vpop.xlane.xlu0 %1166
    %v1168 = vsel %vm202, %v1099, -inf
    %1169 = vmax.xlane.f32.xlu0 %v1168
    %v1170 = vpop.xlane.xlu0 %1169
    %v1171 = vsel %vm202, %v1125, -inf
    %1172 = vmax.xlane.f32.xlu0 %v1171
    %v1173 = vpop.xlane.xlu0 %1172
    %v1174 = vsel %vm202, %v1151, -inf
    %1175 = vmax.xlane.f32.xlu0 %v1174
    %v1176 = vpop.xlane.xlu0 %1175
    %v1177 = vsub.f32 %v969, %v1155
    %v1178 = vsub.f32 %v995, %v1158
    %v1179 = vsub.f32 %v1021, %v1161
    %v1180 = vsub.f32 %v1047, %v1164
    %v1181 = vsub.f32 %v1073, %v1167
    %v1182 = vsub.f32 %v1099, %v1170
    %v1183 = vsub.f32 %v1125, %v1173
    %v1184 = vsub.f32 %v1151, %v1176
    %v1185 = vmul.f32 %v1177, 1.442695
    %v1186 = vpow.pop %v1185
    %v1187 = vmul.f32 %v1178, 1.442695
    %v1188 = vpow.pop %v1187
    %v1189 = vmul.f32 %v1179, 1.442695
    %v1190 = vpow.pop %v1189
    %v1191 = vmul.f32 %v1180, 1.442695
    %v1192 = vpow.pop %v1191
    %v1193 = vmul.f32 %v1181, 1.442695
    %v1194 = vpow.pop %v1193
    %v1195 = vmul.f32 %v1182, 1.442695
    %v1196 = vpow.pop %v1195
    %v1197 = vmul.f32 %v1183, 1.442695
    %v1198 = vpow.pop %v1197
    %v1199 = vmul.f32 %v1184, 1.442695
    %v1200 = vpow.pop %v1199
    %v1201 = vsel %vm202, %v1186, 0.0
    %1202 = vadd.xlane.f32.xlu0 %v1201
    %v1203 = vpop.xlane.xlu0 %1202
    %v1204 = vsel %vm202, %v1188, 0.0
    %1205 = vadd.xlane.f32.xlu0 %v1204
    %v1206 = vpop.xlane.xlu0 %1205
    %v1207 = vsel %vm202, %v1190, 0.0
    %1208 = vadd.xlane.f32.xlu0 %v1207
    %v1209 = vpop.xlane.xlu0 %1208
    %v1210 = vsel %vm202, %v1192, 0.0
    %1211 = vadd.xlane.f32.xlu0 %v1210
    %v1212 = vpop.xlane.xlu0 %1211
    %v1213 = vsel %vm202, %v1194, 0.0
    %1214 = vadd.xlane.f32.xlu0 %v1213
    %v1215 = vpop.xlane.xlu0 %1214
    %v1216 = vsel %vm202, %v1196, 0.0
    %1217 = vadd.xlane.f32.xlu0 %v1216
    %v1218 = vpop.xlane.xlu0 %1217
    %v1219 = vsel %vm202, %v1198, 0.0
    %1220 = vadd.xlane.f32.xlu0 %v1219
    %v1221 = vpop.xlane.xlu0 %1220
    %v1222 = vsel %vm202, %v1200, 0.0
    %1223 = vadd.xlane.f32.xlu0 %v1222
    %v1224 = vpop.xlane.xlu0 %1223
    %v1225 = vrcp.pop %v1203
    %v1226 = vrcp.pop %v1206
    %v1227 = vrcp.pop %v1209
    %v1228 = vrcp.pop %v1212
    %v1229 = vrcp.pop %v1215
    %v1230 = vrcp.pop %v1218
    %v1231 = vrcp.pop %v1221
    %v1232 = vrcp.pop %v1224
    %v1233 = vmul.f32 %v1186, %v1225
    %v1234 = vmul.f32 %v1188, %v1226
    %v1235 = vmul.f32 %v1190, %v1227
    %v1236 = vmul.f32 %v1192, %v1228
    %v1237 = vmul.f32 %v1194, %v1229
    %v1238 = vmul.f32 %v1196, %v1230
    %v1239 = vmul.f32 %v1198, %v1231
    %v1240 = vmul.f32 %v1200, %v1232
    %v1242 = vsel %vm202, %v1233, 0
    %1244 = vmatpush.msra.mxu0 0.0
    %1245 = vmatpush.msra.mxu0 0.0
    %1246 = vmatpush.msra.mxu0 0.0
    %1247 = vmatpush.msra.mxu0 0.0
    %1248 = vmatpush.msra.mxu0 0.0
    %1249 = vmatpush.msra.mxu0 0.0
    %1250 = vmatpush.msra.mxu0 0.0
    %1251 = vmatpush.msra.mxu0 0.0
    %1252 = vmatpush.msra.mxu0 0.0
    %1253 = vmatpush.msra.mxu0 0.0
    %1254 = vmatpush.msra.mxu0 0.0
    %1255 = vmatpush.msra.mxu0 0.0
    %1256 = vmatpush.msra.mxu0 0.0
    %1257 = vmatpush.msra.mxu0 0.0
    %1258 = vmatpush.msra.mxu0 0.0
    %1259 = vmatpush.msra.mxu0 %v906
    %1260 = vmatmul.f32.gmra.mxu0 %v1242
    %v1261 = vpop.f32.mrf.mxu0
    %v1262 = vadd.f32 0.0, %v1261
    %1263 = vdwg.mxu0
    %v1265 = vsel %vm202, %v1234, 0
    %1267 = vmatpush.msra.mxu0 0.0
    %1268 = vmatpush.msra.mxu0 0.0
    %1269 = vmatpush.msra.mxu0 0.0
    %1270 = vmatpush.msra.mxu0 0.0
    %1271 = vmatpush.msra.mxu0 0.0
    %1272 = vmatpush.msra.mxu0 0.0
    %1273 = vmatpush.msra.mxu0 0.0
    %1274 = vmatpush.msra.mxu0 0.0
    %1275 = vmatpush.msra.mxu0 0.0
    %1276 = vmatpush.msra.mxu0 0.0
    %1277 = vmatpush.msra.mxu0 0.0
    %1278 = vmatpush.msra.mxu0 0.0
    %1279 = vmatpush.msra.mxu0 0.0
    %1280 = vmatpush.msra.mxu0 0.0
    %1281 = vmatpush.msra.mxu0 0.0
    %1282 = vmatpush.msra.mxu0 %v909
    %1283 = vmatmul.f32.gmra.mxu0 %v1265
    %v1284 = vpop.f32.mrf.mxu0
    %v1285 = vadd.f32 0.0, %v1284
    %1286 = vdwg.mxu0
    %v1288 = vsel %vm202, %v1235, 0
    %1290 = vmatpush.msra.mxu0 0.0
    %1291 = vmatpush.msra.mxu0 0.0
    %1292 = vmatpush.msra.mxu0 0.0
    %1293 = vmatpush.msra.mxu0 0.0
    %1294 = vmatpush.msra.mxu0 0.0
    %1295 = vmatpush.msra.mxu0 0.0
    %1296 = vmatpush.msra.mxu0 0.0
    %1297 = vmatpush.msra.mxu0 0.0
    %1298 = vmatpush.msra.mxu0 0.0
    %1299 = vmatpush.msra.mxu0 0.0
    %1300 = vmatpush.msra.mxu0 0.0
    %1301 = vmatpush.msra.mxu0 0.0
    %1302 = vmatpush.msra.mxu0 0.0
    %1303 = vmatpush.msra.mxu0 0.0
    %1304 = vmatpush.msra.mxu0 0.0
    %1305 = vmatpush.msra.mxu0 %v928
    %1306 = vmatmul.f32.gmra.mxu0 %v1288
    %v1307 = vpop.f32.mrf.mxu0
    %v1308 = vadd.f32 0.0, %v1307
    %1309 = vdwg.mxu0
    %v1311 = vsel %vm202, %v1236, 0
    %1313 = vmatpush.msra.mxu0 0.0
    %1314 = vmatpush.msra.mxu0 0.0
    %1315 = vmatpush.msra.mxu0 0.0
    %1316 = vmatpush.msra.mxu0 0.0
    %1317 = vmatpush.msra.mxu0 0.0
    %1318 = vmatpush.msra.mxu0 0.0
    %1319 = vmatpush.msra.mxu0 0.0
    %1320 = vmatpush.msra.mxu0 0.0
    %1321 = vmatpush.msra.mxu0 0.0
    %1322 = vmatpush.msra.mxu0 0.0
    %1323 = vmatpush.msra.mxu0 0.0
    %1324 = vmatpush.msra.mxu0 0.0
    %1325 = vmatpush.msra.mxu0 0.0
    %1326 = vmatpush.msra.mxu0 0.0
    %1327 = vmatpush.msra.mxu0 0.0
    %1328 = vmatpush.msra.mxu0 %v930
    %1329 = vmatmul.f32.gmra.mxu0 %v1311
    %v1330 = vpop.f32.mrf.mxu0
    %v1331 = vadd.f32 0.0, %v1330
    %1332 = vdwg.mxu0
    %v1334 = vsel %vm202, %v1237, 0
    %1336 = vmatpush.msra.mxu0 0.0
    %1337 = vmatpush.msra.mxu0 0.0
    %1338 = vmatpush.msra.mxu0 0.0
    %1339 = vmatpush.msra.mxu0 0.0
    %1340 = vmatpush.msra.mxu0 0.0
    %1341 = vmatpush.msra.mxu0 0.0
    %1342 = vmatpush.msra.mxu0 0.0
    %1343 = vmatpush.msra.mxu0 0.0
    %1344 = vmatpush.msra.mxu0 0.0
    %1345 = vmatpush.msra.mxu0 0.0
    %1346 = vmatpush.msra.mxu0 0.0
    %1347 = vmatpush.msra.mxu0 0.0
    %1348 = vmatpush.msra.mxu0 0.0
    %1349 = vmatpush.msra.mxu0 0.0
    %1350 = vmatpush.msra.mxu0 0.0
    %1351 = vmatpush.msra.mxu0 %v934
    %1352 = vmatmul.f32.gmra.mxu0 %v1334
    %v1353 = vpop.f32.mrf.mxu0
    %v1354 = vadd.f32 0.0, %v1353
    %1355 = vdwg.mxu0
    %v1357 = vsel %vm202, %v1238, 0
    %1359 = vmatpush.msra.mxu0 0.0
    %1360 = vmatpush.msra.mxu0 0.0
    %1361 = vmatpush.msra.mxu0 0.0
    %1362 = vmatpush.msra.mxu0 0.0
    %1363 = vmatpush.msra.mxu0 0.0
    %1364 = vmatpush.msra.mxu0 0.0
    %1365 = vmatpush.msra.mxu0 0.0
    %1366 = vmatpush.msra.mxu0 0.0
    %1367 = vmatpush.msra.mxu0 0.0
    %1368 = vmatpush.msra.mxu0 0.0
    %1369 = vmatpush.msra.mxu0 0.0
    %1370 = vmatpush.msra.mxu0 0.0
    %1371 = vmatpush.msra.mxu0 0.0
    %1372 = vmatpush.msra.mxu0 0.0
    %1373 = vmatpush.msra.mxu0 0.0
    %1374 = vmatpush.msra.mxu0 %v936
    %1375 = vmatmul.f32.gmra.mxu0 %v1357
    %v1376 = vpop.f32.mrf.mxu0
    %v1377 = vadd.f32 0.0, %v1376
    %1378 = vdwg.mxu0
    %v1380 = vsel %vm202, %v1239, 0
    %1382 = vmatpush.msra.mxu0 0.0
    %1383 = vmatpush.msra.mxu0 0.0
    %1384 = vmatpush.msra.mxu0 0.0
    %1385 = vmatpush.msra.mxu0 0.0
    %1386 = vmatpush.msra.mxu0 0.0
    %1387 = vmatpush.msra.mxu0 0.0
    %1388 = vmatpush.msra.mxu0 0.0
    %1389 = vmatpush.msra.mxu0 0.0
    %1390 = vmatpush.msra.mxu0 0.0
    %1391 = vmatpush.msra.mxu0 0.0
    %1392 = vmatpush.msra.mxu0 0.0
    %1393 = vmatpush.msra.mxu0 0.0
    %1394 = vmatpush.msra.mxu0 0.0
    %1395 = vmatpush.msra.mxu0 0.0
    %1396 = vmatpush.msra.mxu0 0.0
    %1397 = vmatpush.msra.mxu0 %v940
    %1398 = vmatmul.f32.gmra.mxu0 %v1380
    %v1399 = vpop.f32.mrf.mxu0
    %v1400 = vadd.f32 0.0, %v1399
    %1401 = vdwg.mxu0
    %v1403 = vsel %vm202, %v1240, 0
    %1405 = vmatpush.msra.mxu0 0.0
    %1406 = vmatpush.msra.mxu0 0.0
    %1407 = vmatpush.msra.mxu0 0.0
    %1408 = vmatpush.msra.mxu0 0.0
    %1409 = vmatpush.msra.mxu0 0.0
    %1410 = vmatpush.msra.mxu0 0.0
    %1411 = vmatpush.msra.mxu0 0.0
    %1412 = vmatpush.msra.mxu0 0.0
    %1413 = vmatpush.msra.mxu0 0.0
    %1414 = vmatpush.msra.mxu0 0.0
    %1415 = vmatpush.msra.mxu0 0.0
    %1416 = vmatpush.msra.mxu0 0.0
    %1417 = vmatpush.msra.mxu0 0.0
    %1418 = vmatpush.msra.mxu0 0.0
    %1419 = vmatpush.msra.mxu0 0.0
    %1420 = vmatpush.msra.mxu0 %v942
    %1421 = vmatmul.f32.gmra.mxu0 %v1403
    %v1422 = vpop.f32.mrf.mxu0
    %v1423 = vadd.f32 0.0, %v1422
    %1424 = vdwg.mxu0
    %1427 = vrot.lane.b32.xlu0 %v1308, 8
    %v1428 = vpop.permute.xlu0 %1427
    %1429 = vrot.lane.b32.xlu0 %v1331, 8
    %v1430 = vpop.permute.xlu0 %1429
    %1435 = vrot.lane.b32.xlu0 %v1354, 16
    %v1436 = vpop.permute.xlu0 %1435
    %1437 = vrot.lane.b32.xlu0 %v1377, 16
    %v1438 = vpop.permute.xlu0 %1437
    %1443 = vrot.lane.b32.xlu0 %v1400, 24
    %v1444 = vpop.permute.xlu0 %1443
    %1445 = vrot.lane.b32.xlu0 %v1423, 24
    %v1446 = vpop.permute.xlu0 %1445
    %v1449 = vsel %vm202, %v1262, %v1428
    %v1450 = vsel %vm202, %v1285, %v1430
    %v1451 = vsel %vm731, %v1449, %v1436
    %v1452 = vsel %vm731, %v1450, %v1438
    %v1453 = vsel %vm734, %v1451, %v1444
    %v1454 = vsel %vm734, %v1452, %v1446
    %v1455 = vperm.slane %v89, 0
    %1456 = vrot.lane.b32.xlu0 %v77, 32
    %v1457 = vpop.permute.xlu0 %1456
    %1458 = vrot.lane.b32.xlu0 %v78, 32
    %v1459 = vpop.permute.xlu0 %1458
    %1460 = vrot.lane.b32.xlu0 %v79, 32
    %v1461 = vpop.permute.xlu0 %1460
    %1462 = vrot.lane.b32.xlu0 %v80, 32
    %v1463 = vpop.permute.xlu0 %1462
    %v1469 = vsel %vm98, %v1453, 0
    %v1472 = vsel %vm98, %v1454, 0
    %1474 = vmatpush.msra.mxu0 0.0
    %1475 = vmatpush.msra.mxu0 0.0
    %1476 = vmatpush.msra.mxu0 0.0
    %1477 = vmatpush.msra.mxu0 0.0
    %1478 = vmatpush.msra.mxu0 0.0
    %1479 = vmatpush.msra.mxu0 0.0
    %1480 = vmatpush.msra.mxu0 0.0
    %1481 = vmatpush.msra.mxu0 0.0
    %1482 = vmatpush.msra.mxu0 0.0
    %1483 = vmatpush.msra.mxu0 0.0
    %1484 = vmatpush.msra.mxu0 0.0
    %1485 = vmatpush.msra.mxu0 0.0
    %1486 = vmatpush.msra.mxu0 %v1463
    %1487 = vmatpush.msra.mxu0 %v1461
    %1488 = vmatpush.msra.mxu0 %v1459
    %1489 = vmatpush.msra.mxu0 %v1457
    %1490 = vmatmul.f32.gmra.mxu0 %v1469
    %v1491 = vpop.f32.mrf.mxu0
    %v1492 = vadd.f32 %v1455, %v1491
    %1493 = vmatmul.f32.gmra.mxu0 %v1472
    %v1494 = vpop.f32.mrf.mxu0
    %v1495 = vadd.f32 %v1455, %v1494
    %1496 = vdwg.mxu0
    %v1497 = vadd.f32 %v783, %v1492
    %v1498 = vadd.f32 %v784, %v1495
    %v1499 = vsel %vm98, %v1497, 0.0
    %1500 = vadd.xlane.f32.xlu0 %v1499
    %v1501 = vpop.xlane.xlu0 %1500
    %v1502 = vsel %vm98, %v1498, 0.0
    %1503 = vadd.xlane.f32.xlu0 %v1502
    %v1504 = vpop.xlane.xlu0 %1503
    %v1505 = vmul.f32 %v1501, %v111
    %v1506 = vmul.f32 %v1504, %v111
    %v1507 = vsub.f32 %v1497, %v1505
    %v1508 = vsub.f32 %v1498, %v1506
    %v1509 = vmul.f32 %v1507, %v1507
    %v1510 = vmul.f32 %v1508, %v1508
    %v1511 = vsel %vm98, %v1509, 0.0
    %1512 = vadd.xlane.f32.xlu0 %v1511
    %v1513 = vpop.xlane.xlu0 %1512
    %v1514 = vsel %vm98, %v1510, 0.0
    %1515 = vadd.xlane.f32.xlu0 %v1514
    %v1516 = vpop.xlane.xlu0 %1515
    %v1517 = vmul.f32 %v1513, %v111
    %v1518 = vmul.f32 %v1516, %v111
    %v1519 = vadd.f32 %v1517, 1e-05
    %v1520 = vadd.f32 %v1518, 1e-05
    %v1521 = vrsqrt.pop %v1519
    %v1522 = vmul.f32 %v1521, %v1519
    %v1523 = vmul.f32 %v1522, %v1521
    %v1524 = vmul.f32 0.5, %v1523
    %v1525 = vsub.f32 1.5, %v1524
    %v1526 = vmul.f32 %v1521, %v1525
    %vm1527 = vweird.f32 %v1519
    %vm1528 = vweird.f32 %v1521
    %vm1529 = vmor %vm1527, %vm1528
    %v1530 = vsel %vm1529, %v1521, %v1526
    %v1531 = vrsqrt.pop %v1520
    %v1532 = vmul.f32 %v1531, %v1520
    %v1533 = vmul.f32 %v1532, %v1531
    %v1534 = vmul.f32 0.5, %v1533
    %v1535 = vsub.f32 1.5, %v1534
    %v1536 = vmul.f32 %v1531, %v1535
    %vm1537 = vweird.f32 %v1520
    %vm1538 = vweird.f32 %v1531
    %vm1539 = vmor %vm1537, %vm1538
    %v1540 = vsel %vm1539, %v1531, %v1536
    %v1541 = vmul.f32 %v1507, %v1530
    %v1542 = vmul.f32 %v1508, %v1540
    %v1543 = vperm.slane %v96, 0
    %v1544 = vmul.f32 %v1541, %v1543
    %v1545 = vmul.f32 %v1542, %v1543
    %v1546 = vperm.slane %v97, 0
    %v1547 = vadd.f32 %v1544, %v1546
    %v1548 = vadd.f32 %v1545, %v1546
    %v1549 = vperm.slane %v90, 0
    %v1551 = vsel %vm98, %v1547, 0
    %v1554 = vsel %vm98, %v1548, 0
    %1556 = vmatpush.msra.mxu0 0.0
    %1557 = vmatpush.msra.mxu0 0.0
    %1558 = vmatpush.msra.mxu0 0.0
    %1559 = vmatpush.msra.mxu0 0.0
    %1560 = vmatpush.msra.mxu0 0.0
    %1561 = vmatpush.msra.mxu0 0.0
    %1562 = vmatpush.msra.mxu0 0.0
    %1563 = vmatpush.msra.mxu0 0.0
    %1564 = vmatpush.msra.mxu0 0.0
    %1565 = vmatpush.msra.mxu0 0.0
    %1566 = vmatpush.msra.mxu0 0.0
    %1567 = vmatpush.msra.mxu0 0.0
    %1568 = vmatpush.msra.mxu0 %v84
    %1569 = vmatpush.msra.mxu0 %v83
    %1570 = vmatpush.msra.mxu0 %v82
    %1571 = vmatpush.msra.mxu0 %v81
    %1572 = vmatmul.f32.gmra.mxu0 %v1551
    %v1573 = vpop.f32.mrf.mxu0
    %v1574 = vadd.f32 %v1549, %v1573
    %1575 = vmatmul.f32.gmra.mxu0 %v1554
    %v1576 = vpop.f32.mrf.mxu0
    %v1577 = vadd.f32 %v1549, %v1576
    %1578 = vdwg.mxu0
    %v1579 = vmax.f32 %v1574, 0.0
    %v1580 = vmax.f32 %v1577, 0.0
    %1583 = vrot.lane.b32.xlu0 %v1579, 96
    %v1584 = vpop.permute.xlu0 %1583
    %1585 = vrot.lane.b32.xlu0 %v1580, 96
    %v1586 = vpop.permute.xlu0 %1585
    %1591 = vrot.lane.b32.xlu0 %v81, 32
    %v1592 = vpop.permute.xlu0 %1591
    %1593 = vrot.lane.b32.xlu0 %v82, 32
    %v1594 = vpop.permute.xlu0 %1593
    %1595 = vrot.lane.b32.xlu0 %v83, 32
    %v1596 = vpop.permute.xlu0 %1595
    %1597 = vrot.lane.b32.xlu0 %v84, 32
    %v1598 = vpop.permute.xlu0 %1597
    %v1603 = vsel %vm98, %v1584, 0
    %v1605 = vsel %vm98, %v1586, 0
    %1607 = vmatpush.msra.mxu0 0.0
    %1608 = vmatpush.msra.mxu0 0.0
    %1609 = vmatpush.msra.mxu0 0.0
    %1610 = vmatpush.msra.mxu0 0.0
    %1611 = vmatpush.msra.mxu0 0.0
    %1612 = vmatpush.msra.mxu0 0.0
    %1613 = vmatpush.msra.mxu0 0.0
    %1614 = vmatpush.msra.mxu0 0.0
    %1615 = vmatpush.msra.mxu0 0.0
    %1616 = vmatpush.msra.mxu0 0.0
    %1617 = vmatpush.msra.mxu0 0.0
    %1618 = vmatpush.msra.mxu0 0.0
    %1619 = vmatpush.msra.mxu0 %v1598
    %1620 = vmatpush.msra.mxu0 %v1596
    %1621 = vmatpush.msra.mxu0 %v1594
    %1622 = vmatpush.msra.mxu0 %v1592
    %1623 = vmatmul.f32.gmra.mxu0 %v1603
    %v1624 = vpop.f32.mrf.mxu0
    %v1625 = vadd.f32 0.0, %v1624
    %1626 = vmatmul.f32.gmra.mxu0 %v1605
    %v1627 = vpop.f32.mrf.mxu0
    %v1628 = vadd.f32 0.0, %v1627
    %1629 = vdwg.mxu0
    %1630 = vrot.lane.b32.xlu0 %v81, 64
    %v1631 = vpop.permute.xlu0 %1630
    %1632 = vrot.lane.b32.xlu0 %v82, 64
    %v1633 = vpop.permute.xlu0 %1632
    %1634 = vrot.lane.b32.xlu0 %v83, 64
    %v1635 = vpop.permute.xlu0 %1634
    %1636 = vrot.lane.b32.xlu0 %v84, 64
    %v1637 = vpop.permute.xlu0 %1636
    %v1642 = vsel %vm98, %v1579, 0
    %v1644 = vsel %vm98, %v1580, 0
    %1646 = vmatpush.msra.mxu0 0.0
    %1647 = vmatpush.msra.mxu0 0.0
    %1648 = vmatpush.msra.mxu0 0.0
    %1649 = vmatpush.msra.mxu0 0.0
    %1650 = vmatpush.msra.mxu0 0.0
    %1651 = vmatpush.msra.mxu0 0.0
    %1652 = vmatpush.msra.mxu0 0.0
    %1653 = vmatpush.msra.mxu0 0.0
    %1654 = vmatpush.msra.mxu0 0.0
    %1655 = vmatpush.msra.mxu0 0.0
    %1656 = vmatpush.msra.mxu0 0.0
    %1657 = vmatpush.msra.mxu0 0.0
    %1658 = vmatpush.msra.mxu0 %v1637
    %1659 = vmatpush.msra.mxu0 %v1635
    %1660 = vmatpush.msra.mxu0 %v1633
    %1661 = vmatpush.msra.mxu0 %v1631
    %1662 = vmatmul.f32.gmra.mxu0 %v1642
    %v1663 = vpop.f32.mrf.mxu0
    %v1664 = vadd.f32 %v1625, %v1663
    %1665 = vmatmul.f32.gmra.mxu0 %v1644
    %v1666 = vpop.f32.mrf.mxu0
    %v1667 = vadd.f32 %v1628, %v1666
    %1668 = vdwg.mxu0
    %v1669 = vperm.slane %v91, 0
    %v1670 = vadd.f32 %v1664, %v1669
    %v1671 = vadd.f32 %v1667, %v1669
    %v1672 = vadd.f32 %v1497, %v1670
    %v1673 = vadd.f32 %v1498, %v1671
    %1674 = vst.msk [vmem:[#allocation8] sm:$0xff] %vm98, %v1672
    %1675 = vst.msk [vmem:[#allocation8 + $0x8] sm:$0xff] %vm98, %v1673
    // Predicated region
    $region34: #{decoder_block.1} parent=1 // pred_check
      _
    $region35: #{decoder_block.1} parent=1 // pred_check_branch
      %1677 = sbr.rel (0) target = $region37
    $region36: #{decoder_block.1} parent=1 // pred_region
      %1679 = vsyncadd [#allocation4], 0
      %s1680 = sshll.u32 [#allocation8], 4
      %s1681 = int_to_ptr.vmem [resolvable:$true] %s1680
      %s1682 = sshll.u32 %s5, 4
      %s1683 = int_to_ptr.hbm [resolvable:$true] %s1682
      %1688 = dma.vmem_to_hbm [thread:$0]  %s1681, 256, %s1683, [#allocation4], 128, 128, 8
    $region37: #{decoder_block.1} parent=1 // pred_fallthru
      _
    // Predicated region
    $region38: #{decoder_block.1} parent=1 // pred_check
      _
    $region39: #{decoder_block.1} parent=1 // pred_check_branch
      %1690 = sbr.rel (0) target = $region41
    $region40: #{decoder_block.1} parent=1 // pred_region
      %1692 = dma.done [#allocation4], 256
    $region41: #{decoder_block.1} parent=1 // pred_fallthru
      _
    %1693 = vsyncpa [#allocation3], 1
    %1694 = vsyncpa [#allocation6], 1
    %1695 = vsyncpa [#allocation4], 1

</llo_original>
